<compile_context>
chip_gen: v6e
topology: v6e:2x2x1
jax: 0.10.0
libtpu: 0.0.40
codegen_flags: <defaults>
</compile_context>

<pallas_src>
import functools

import jax
import jax.numpy as jnp
from jax.experimental import pallas as pl
from jax.experimental.pallas import tpu as pltpu


def _bigram_logits_kernel(idx_ref, table_ref, logits_ref):
    """Inference path: embedding gather only (no cross-entropy work).

    idx_ref    : (TM, 1) int32   token ids for this row tile
    table_ref  : (V, V)  float32 full embedding table (VMEM resident)
    logits_ref : (TM, V) float32 gathered embedding rows (= logits)
    """
    TM = idx_ref.shape[0]
    V = table_ref.shape[1]
    lane = jax.lax.broadcasted_iota(jnp.int32, (TM, V), 1)
    onehot = (lane == idx_ref[...]).astype(jnp.float32)
    logits_ref[...] = jnp.dot(onehot, table_ref[...],
                              preferred_element_type=jnp.float32)


def _bigram_loss_kernel(idx_ref, tgt_ref, table_ref, logits_ref, loss_ref, *,
                        n_valid, row_tile):
    """Training path: gather + fused, row-masked cross-entropy sum.

    idx_ref    : (TM, 1) int32   token ids for this row tile
    tgt_ref    : (TM, 1) int32   target ids for this row tile
    table_ref  : (V, V)  float32 full embedding table (VMEM resident)
    logits_ref : (TM, V) float32 gathered embedding rows (= logits)
    loss_ref   : (1, 1)  float32 CE sum accumulator, VMEM-resident across the
                                 whole grid (same block index every step), so
                                 the grid axis is marked 'arbitrary'.
    """
    i = pl.program_id(0)
    V = table_ref.shape[1]

    lane = jax.lax.broadcasted_iota(jnp.int32, (row_tile, V), 1)

    # Embedding gather as one-hot @ table on the MXU (bit-exact gather in f32).
    onehot_idx = (lane == idx_ref[...]).astype(jnp.float32)
    logits = jnp.dot(onehot_idx, table_ref[...],
                     preferred_element_type=jnp.float32)
    logits_ref[...] = logits

    # Numerically-stable cross entropy: logsumexp(logits) - logits[target].
    m = jnp.max(logits, axis=-1, keepdims=True)
    lse = m + jnp.log(jnp.sum(jnp.exp(logits - m), axis=-1, keepdims=True))
    onehot_tgt = (lane == tgt_ref[...]).astype(jnp.float32)
    tgt_logit = jnp.sum(onehot_tgt * logits, axis=-1, keepdims=True)
    ce = lse - tgt_logit                                     # (TM, 1)

    # Mask rows that only exist because N was padded up to a row_tile multiple.
    row = jax.lax.broadcasted_iota(jnp.int32, (row_tile, 1), 0) + i * row_tile
    ce = jnp.where(row < n_valid, ce, 0.0)
    tile_sum = jnp.sum(ce, axis=0, keepdims=True)            # (1, 1)

    @pl.when(i == 0)
    def _():
        loss_ref[...] = jnp.zeros_like(loss_ref)

    loss_ref[...] += tile_sum


def bigram_forward(idx, table, targets=None, *, row_tile=256):
    """JAX/Pallas equivalent of BigramModel.forward.

    idx     : (B, T) int32
    table   : (V, V) float32 embedding table
    targets : optional (B, T) int32
    row_tile: rows of logits produced per grid step.  256 fills the v6e/v7x
              2x256^2 MXU and amortizes per-step pipeline overhead; use 128 on
              v5e (4x128^2 MXU).
    Returns (logits, loss):
      targets is None -> logits (B, T, V), loss None
      else            -> logits (B*T, V), loss scalar (mean cross-entropy)
    """
    B, T = idx.shape
    V = table.shape[0]
    N = B * T

    # Pad the row dimension up to a multiple of row_tile; padded rows use
    # token id 0 (valid gather) and are masked out of the loss / sliced off.
    n_pad = pl.cdiv(N, row_tile) * row_tile
    num_tiles = n_pad // row_tile

    idx_flat = jnp.pad(idx.reshape(N).astype(jnp.int32),
                       (0, n_pad - N)).reshape(n_pad, 1)

    # Explicit VMEM budget: double-buffered table + logits tile + index tiles,
    # plus generous headroom for in-kernel temporaries.
    # TODO(synk): for V*V*4B beyond ~30 MiB (v7x's 64 MiB VMEM) switch from the
    # resident-table one-hot matmul to a scalar-prefetch row-gather DMA.
    table_bytes = V * V * 4
    logits_tile_bytes = row_tile * V * 4
    idx_tile_bytes = row_tile * 4
    vmem_limit = int(min(
        2 * table_bytes + 2 * logits_tile_bytes + 4 * idx_tile_bytes + (8 << 20),
        64 << 20,
    ))

    if targets is None:
        # Inference path: no cross-entropy work, no loss output, grid parallel.
        logits_pad = pl.pallas_call(
            _bigram_logits_kernel,
            out_shape=jax.ShapeDtypeStruct((n_pad, V), jnp.float32),
            grid_spec=pltpu.PrefetchScalarGridSpec(
                num_scalar_prefetch=0,
                grid=(num_tiles,),
                in_specs=[
                    pl.BlockSpec((row_tile, 1), lambda i: (i, 0)),  # idx rows
                    pl.BlockSpec((V, V), lambda i: (0, 0)),         # full table
                ],
                out_specs=pl.BlockSpec((row_tile, V), lambda i: (i, 0)),
            ),
            compiler_params=pltpu.CompilerParams(
                dimension_semantics=("parallel",),
                vmem_limit_bytes=vmem_limit,
            ),
        )(idx_flat, table)
        return logits_pad[:N].reshape(B, T, V), None

    tgt_flat = jnp.pad(targets.reshape(N).astype(jnp.int32),
                       (0, n_pad - N)).reshape(n_pad, 1)

    kernel = functools.partial(_bigram_loss_kernel, n_valid=N,
                               row_tile=row_tile)
    logits_pad, loss_sum = pl.pallas_call(
        kernel,
        out_shape=(
            jax.ShapeDtypeStruct((n_pad, V), jnp.float32),
            jax.ShapeDtypeStruct((1, 1), jnp.float32),
        ),
        grid_spec=pltpu.PrefetchScalarGridSpec(
            num_scalar_prefetch=0,
            grid=(num_tiles,),
            in_specs=[
                pl.BlockSpec((row_tile, 1), lambda i: (i, 0)),  # idx rows
                pl.BlockSpec((row_tile, 1), lambda i: (i, 0)),  # target rows
                pl.BlockSpec((V, V), lambda i: (0, 0)),         # full table
            ],
            out_specs=[
                pl.BlockSpec((row_tile, V), lambda i: (i, 0)),
                pl.BlockSpec((1, 1), lambda i: (0, 0)),         # loss accumulator
            ],
        ),
        compiler_params=pltpu.CompilerParams(
            # Single loss accumulator spans the whole grid -> 'arbitrary'.
            dimension_semantics=("arbitrary",),
            vmem_limit_bytes=vmem_limit,
        ),
    )(idx_flat, tgt_flat, table)

    loss = loss_sum[0, 0] / jnp.float32(N)   # glue: scalar divide only
    return logits_pad[:N], loss


def _reference(idx, table, targets):
    """Pure-JAX reference matching PyTorch semantics."""
    logits = table[idx]                      # (B, T, V)
    B, T, V = logits.shape
    lf = logits.reshape(B * T, V)
    tf = targets.reshape(B * T)
    lse = jax.nn.logsumexp(lf, axis=-1)
    tgt = jnp.take_along_axis(lf, tf[:, None], axis=-1)[:, 0]
    return lf, jnp.mean(lse - tgt)


if __name__ == "__main__":
    vocab_size = 128   # lane-aligned vocab for the demo
    B, T = 2, 8

    key = jax.random.PRNGKey(0)
    k_table, k_idx, k_tgt = jax.random.split(key, 3)
    # nn.Embedding default init: N(0, 1)
    table = jax.random.normal(k_table, (vocab_size, vocab_size), dtype=jnp.float32)
    idx = jax.random.randint(k_idx, (B, T), 0, vocab_size, dtype=jnp.int32)
    targets = jax.random.randint(k_tgt, (B, T), 0, vocab_size, dtype=jnp.int32)

    # Training path: (B*T, V) logits + scalar loss (loss reduced in-kernel).
    logits, loss = bigram_forward(idx, table, targets)
    jax.block_until_ready((logits, loss))

    # Inference path: (B, T, V) logits, loss=None, CE work skipped entirely.
    logits_nt, loss_nt = bigram_forward(idx, table, None)
    jax.block_until_ready(logits_nt)
    assert loss_nt is None

    # Correctness check against pure-JAX reference.
    ref_logits, ref_loss = _reference(idx, table, targets)
    assert jnp.allclose(logits, ref_logits, atol=1e-5), "logits mismatch"
    assert jnp.allclose(loss, ref_loss, atol=1e-5), "loss mismatch"
    assert jnp.allclose(logits_nt.reshape(B * T, vocab_size), ref_logits, atol=1e-5)

    # TODO(synk): BigramModel.generate (torch.multinomial sampling loop) is not
    # translated; only the forward pass is implemented here.
    print("KERNEL_OK")
</pallas_src>

<mosaic_0001>
module attributes {stable_mosaic.version = 11 : i64} {
  func.func @_bigram_loss_kernel(%arg0: i32, %arg1: memref<256x1xi32, #tpu.memory_space<vmem>>, %arg2: memref<256x1xi32, #tpu.memory_space<vmem>>, %arg3: memref<128x128xf32, #tpu.memory_space<vmem>>, %arg4: memref<256x128xf32, #tpu.memory_space<vmem>>, %arg5: memref<1x1xf32, #tpu.memory_space<vmem>>) attributes {dimension_semantics = [#tpu.dimension_semantics<arbitrary>], iteration_bounds = array<i64: 1>, scalar_prefetch = 0 : i64, scratch_operands = 0 : i64, tpu.core_type = #tpu.core_type<tc>, window_params = [{transform_indices = @transform_0, window_bounds = array<i64: 256, 1>}, {transform_indices = @transform_1, window_bounds = array<i64: 256, 1>}, {pipeline_mode = #tpu.pipeline_mode<synchronous>, transform_indices = @transform_2, window_bounds = array<i64: 128, 128>}, {transform_indices = @transform_3, window_bounds = array<i64: 256, 128>}, {pipeline_mode = #tpu.pipeline_mode<synchronous>, transform_indices = @transform_4, window_bounds = array<i64: 1, 1>}]} {
    %0 = tpu.iota {dimensions = array<i32: 1>} : vector<256x128xi32>
    %c0 = arith.constant 0 : index
    %c0_0 = arith.constant 0 : index
    %1 = vector.load %arg1[%c0, %c0_0] : memref<256x1xi32, #tpu.memory_space<vmem>>, vector<256x1xi32>
    %2 = vector.broadcast %1 : vector<256x1xi32> to vector<256x128xi32>
    %3 = arith.cmpi eq, %0, %2 : vector<256x128xi32>
    %4 = arith.extui %3 : vector<256x128xi1> to vector<256x128xi32>
    %5 = arith.sitofp %4 : vector<256x128xi32> to vector<256x128xf32>
    %c0_1 = arith.constant 0 : index
    %c0_2 = arith.constant 0 : index
    %6 = vector.load %arg3[%c0_1, %c0_2] : memref<128x128xf32, #tpu.memory_space<vmem>>, vector<128x128xf32>
    %cst = arith.constant dense<0.000000e+00> : vector<256x128xf32>
    %7 = tpu.matmul %5, %6, %cst {dimension_numbers = #tpu.dot_dimension_numbers<[1], [0], [0], [1], [0, 0, 1, 1], [], []>} : vector<256x128xf32>, vector<128x128xf32>, vector<256x128xf32> -> vector<256x128xf32>
    %c0_3 = arith.constant 0 : index
    %c0_4 = arith.constant 0 : index
    %8 = vector.load %arg4[%c0_3, %c0_4] : memref<256x128xf32, #tpu.memory_space<vmem>>, vector<256x128xf32>
    tpu.vector_store %arg4[%c0_3, %c0_4], %7 {strides = array<i32>} : memref<256x128xf32, #tpu.memory_space<vmem>>, vector<256x128xf32>,
    %cst_5 = arith.constant dense<0xFF800000> : vector<256xf32>
    %9 = vector.multi_reduction <maximumf>, %7, %cst_5 [1] : vector<256x128xf32> to vector<256xf32>
    %10 = vector.shape_cast %9 : vector<256xf32> to vector<256x1xf32>
    %11 = vector.broadcast %10 : vector<256x1xf32> to vector<256x128xf32>
    %12 = arith.subf %7, %11 : vector<256x128xf32>
    %13 = math.exp %12 : vector<256x128xf32>
    %cst_6 = arith.constant dense<0.000000e+00> : vector<256xf32>
    %14 = vector.multi_reduction <add>, %13, %cst_6 [1] : vector<256x128xf32> to vector<256xf32>
    %15 = vector.shape_cast %14 : vector<256xf32> to vector<256x1xf32>
    %16 = math.log %15 : vector<256x1xf32>
    %17 = arith.addf %10, %16 : vector<256x1xf32>
    %c0_7 = arith.constant 0 : index
    %c0_8 = arith.constant 0 : index
    %18 = vector.load %arg2[%c0_7, %c0_8] : memref<256x1xi32, #tpu.memory_space<vmem>>, vector<256x1xi32>
    %19 = vector.broadcast %18 : vector<256x1xi32> to vector<256x128xi32>
    %20 = arith.cmpi eq, %0, %19 : vector<256x128xi32>
    %21 = arith.extui %20 : vector<256x128xi1> to vector<256x128xi32>
    %22 = arith.sitofp %21 : vector<256x128xi32> to vector<256x128xf32>
    %23 = arith.mulf %22, %7 : vector<256x128xf32>
    %cst_9 = arith.constant dense<0.000000e+00> : vector<256xf32>
    %24 = vector.multi_reduction <add>, %23, %cst_9 [1] : vector<256x128xf32> to vector<256xf32>
    %25 = vector.shape_cast %24 : vector<256xf32> to vector<256x1xf32>
    %26 = arith.subf %17, %25 : vector<256x1xf32>
    %27 = tpu.iota {dimensions = array<i32: 0>} : vector<256x1xi32>
    %c256_i32 = arith.constant 256 : i32
    %28 = arith.muli %arg0, %c256_i32 : i32
    %29 = vector.broadcast %28 : i32 to vector<256x1xi32>
    %30 = arith.addi %27, %29 : vector<256x1xi32>
    %c16_i32 = arith.constant 16 : i32
    %31 = vector.broadcast %c16_i32 : i32 to vector<256x1xi32>
    %32 = arith.cmpi slt, %30, %31 : vector<256x1xi32>
    %cst_10 = arith.constant 0.000000e+00 : f32
    %33 = vector.broadcast %cst_10 : f32 to vector<256x1xf32>
    %34 = arith.select %32, %26, %33 : vector<256x1xi1>, vector<256x1xf32>
    %cst_11 = arith.constant dense<0.000000e+00> : vector<1xf32>
    %35 = vector.multi_reduction <add>, %34, %cst_11 [0] : vector<256x1xf32> to vector<1xf32>
    %36 = vector.shape_cast %35 : vector<1xf32> to vector<1x1xf32>
    %c0_i32 = arith.constant 0 : i32
    %37 = arith.cmpi eq, %arg0, %c0_i32 : i32
    %38 = arith.extui %37 : i1 to i32
    %c0_i32_12 = arith.constant 0 : i32
    %39 = arith.cmpi ne, %38, %c0_i32_12 : i32
    scf.if %39 {
      %cst_17 = arith.constant 0.000000e+00 : f32
      %43 = vector.broadcast %cst_17 : f32 to vector<1x1xf32>
      %c0_18 = arith.constant 0 : index
      %c0_19 = arith.constant 0 : index
      %44 = vector.load %arg5[%c0_18, %c0_19] : memref<1x1xf32, #tpu.memory_space<vmem>>, vector<1x1xf32>
      tpu.vector_store %arg5[%c0_18, %c0_19], %43 {strides = array<i32>} : memref<1x1xf32, #tpu.memory_space<vmem>>, vector<1x1xf32>,
    } else {
    }
    %c0_13 = arith.constant 0 : index
    %c0_14 = arith.constant 0 : index
    %40 = vector.load %arg5[%c0_13, %c0_14] : memref<1x1xf32, #tpu.memory_space<vmem>>, vector<1x1xf32>
    %41 = arith.addf %40, %36 : vector<1x1xf32>
    %c0_15 = arith.constant 0 : index
    %c0_16 = arith.constant 0 : index
    %42 = vector.load %arg5[%c0_15, %c0_16] : memref<1x1xf32, #tpu.memory_space<vmem>>, vector<1x1xf32>
    tpu.vector_store %arg5[%c0_15, %c0_16], %41 {strides = array<i32>} : memref<1x1xf32, #tpu.memory_space<vmem>>, vector<1x1xf32>,
    return
  }
  func.func @transform_0(%arg0: i32) -> (i32, i32) {
    %c0_i32 = arith.constant 0 : i32
    %c0_i32_0 = arith.constant 0 : i32
    return %arg0, %c0_i32 : i32, i32
  }
  func.func @transform_1(%arg0: i32) -> (i32, i32) {
    %c0_i32 = arith.constant 0 : i32
    %c0_i32_0 = arith.constant 0 : i32
    return %arg0, %c0_i32 : i32, i32
  }
  func.func @transform_2(%arg0: i32) -> (i32, i32) {
    %c0_i32 = arith.constant 0 : i32
    %c0_i32_0 = arith.constant 0 : i32
    %c0_i32_1 = arith.constant 0 : i32
    return %c0_i32, %c0_i32_0 : i32, i32
  }
  func.func @transform_3(%arg0: i32) -> (i32, i32) {
    %c0_i32 = arith.constant 0 : i32
    %c0_i32_0 = arith.constant 0 : i32
    return %arg0, %c0_i32 : i32, i32
  }
  func.func @transform_4(%arg0: i32) -> (i32, i32) {
    %c0_i32 = arith.constant 0 : i32
    %c0_i32_0 = arith.constant 0 : i32
    %c0_i32_1 = arith.constant 0 : i32
    return %c0_i32, %c0_i32_0 : i32, i32
  }
}

</mosaic_0001>

<llo_original>
// kernel: tpu_custom_call.1
$region0: #{tpu_custom_call.1}
  #allocation0 [shape = 'u32[]', space=smem, size = 0x4, offset = 0x4, fixed_abs, tag = 'smem constant byte address 0x4 - core index']
  #allocation1 [shape = 'u32[144,128]{1,0:T(1,128)}', space=vmem, size = 0x12000, scoped, tag = 'internal scratch']
  %s0 = inlined_call_operand.vmem [shape: s32[256,1], index: 0, kind: input, shape index: {}]
  %s1 = inlined_call_operand.vmem [shape: s32[256,1], index: 1, kind: input, shape index: {}]
  %s2 = inlined_call_operand.vmem [shape: f32[128,128], index: 2, kind: input, shape index: {}]
  %s3 = inlined_call_operand.hbm [shape: f32[256,128], index: 3, kind: output, shape index: {0}]
  %s4 = inlined_call_operand.hbm [shape: f32[1,1], index: 4, kind: output, shape index: {1}]
  %5 = xla_tuple %s3, %s4
  %s6 = sld [smem:[#allocation0]]
  $region34: #{tpu_custom_call.1} parent=0
    _
  %s8 = ssub.s32 1, %s6
  %s9 = scalar_select 0, %s8, %s6
  $region1: #{tpu_custom_call.1} parent=0
    #allocation2 [shape = 'u8[131072]{0}', space=vmem, size = 0x20000, scoped, tag = 'output window, operand 0, single buffered']
    #allocation3 [shape = 's32[1]{0}', space=sflag, size = 0x4, scoped, tag = 'scoped memory for tpu_custom_call.1']
    #allocation4 [shape = 'u8[512]{0}', space=vmem, size = 0x400, scoped, tag = 'output window, operand 1, single buffered']
    #allocation5 [shape = 's32[1]{0}', space=sflag, size = 0x4, scoped, tag = 'scoped memory for tpu_custom_call.1']
    %10 = vsyncpa [#allocation3], 0
    %11 = vsyncpa [#allocation5], 0
    // Predicated region
    $region2: #{tpu_custom_call.1} parent=1 // pred_check
      _
    $region3: #{tpu_custom_call.1} parent=1 // pred_check_branch
      %13 = sbr.rel (0) target = $region5
    $region4: #{tpu_custom_call.1} parent=1 // pred_region
      _
    $region5: #{tpu_custom_call.1} parent=1 // pred_fallthru
      _
    // Predicated region
    $region6: #{tpu_custom_call.1} parent=1 // pred_check
      _
    $region7: #{tpu_custom_call.1} parent=1 // pred_check_branch
      %15 = sbr.rel (0) target = $region9
    $region8: #{tpu_custom_call.1} parent=1 // pred_region
      _
    $region9: #{tpu_custom_call.1} parent=1 // pred_fallthru
      _
    // Predicated region
    $region10: #{tpu_custom_call.1} parent=1 // pred_check
      _
    $region11: #{tpu_custom_call.1} parent=1 // pred_check_branch
      %17 = sbr.rel (0) target = $region13
    $region12: #{tpu_custom_call.1} parent=1 // pred_region
      _
    $region13: #{tpu_custom_call.1} parent=1 // pred_fallthru
      _
    %v18 = vlaneseq
    %v19 = vand.u32 %v18, 127
    %v20 = vld [vmem:[%s0] sm:$0xff]
    %v21 = vld [vmem:[%s0 + $0x8] sm:$0xff]
    %v22 = vld [vmem:[%s0 + $0x10] sm:$0xff]
    %v23 = vld [vmem:[%s0 + $0x18] sm:$0xff]
    %v24 = vld [vmem:[%s0 + $0x20] sm:$0xff]
    %v25 = vld [vmem:[%s0 + $0x28] sm:$0xff]
    %v26 = vld [vmem:[%s0 + $0x30] sm:$0xff]
    %v27 = vld [vmem:[%s0 + $0x38] sm:$0xff]
    %v28 = vld [vmem:[%s0 + $0x40] sm:$0xff]
    %v29 = vld [vmem:[%s0 + $0x48] sm:$0xff]
    %v30 = vld [vmem:[%s0 + $0x50] sm:$0xff]
    %v31 = vld [vmem:[%s0 + $0x58] sm:$0xff]
    %v32 = vld [vmem:[%s0 + $0x60] sm:$0xff]
    %v33 = vld [vmem:[%s0 + $0x68] sm:$0xff]
    %v34 = vld [vmem:[%s0 + $0x70] sm:$0xff]
    %v35 = vld [vmem:[%s0 + $0x78] sm:$0xff]
    %v36 = vld [vmem:[%s0 + $0x80] sm:$0xff]
    %v37 = vld [vmem:[%s0 + $0x88] sm:$0xff]
    %v38 = vld [vmem:[%s0 + $0x90] sm:$0xff]
    %v39 = vld [vmem:[%s0 + $0x98] sm:$0xff]
    %v40 = vld [vmem:[%s0 + $0xa0] sm:$0xff]
    %v41 = vld [vmem:[%s0 + $0xa8] sm:$0xff]
    %v42 = vld [vmem:[%s0 + $0xb0] sm:$0xff]
    %v43 = vld [vmem:[%s0 + $0xb8] sm:$0xff]
    %v44 = vld [vmem:[%s0 + $0xc0] sm:$0xff]
    %v45 = vld [vmem:[%s0 + $0xc8] sm:$0xff]
    %v46 = vld [vmem:[%s0 + $0xd0] sm:$0xff]
    %v47 = vld [vmem:[%s0 + $0xd8] sm:$0xff]
    %v48 = vld [vmem:[%s0 + $0xe0] sm:$0xff]
    %v49 = vld [vmem:[%s0 + $0xe8] sm:$0xff]
    %v50 = vld [vmem:[%s0 + $0xf0] sm:$0xff]
    %v51 = vld [vmem:[%s0 + $0xf8] sm:$0xff]
    %52 = vset.pattern.permute.xlu0 0
    %53 = vperm.xlu0 %52, %v20
    %v54 = vpop.permute.xlu0 %53
    %55 = vset.pattern.permute.xlu0 0
    %56 = vperm.xlu0 %55, %v21
    %v57 = vpop.permute.xlu0 %56
    %58 = vset.pattern.permute.xlu0 0
    %59 = vperm.xlu0 %58, %v22
    %v60 = vpop.permute.xlu0 %59
    %61 = vset.pattern.permute.xlu0 0
    %62 = vperm.xlu0 %61, %v23
    %v63 = vpop.permute.xlu0 %62
    %64 = vset.pattern.permute.xlu0 0
    %65 = vperm.xlu0 %64, %v24
    %v66 = vpop.permute.xlu0 %65
    %67 = vset.pattern.permute.xlu0 0
    %68 = vperm.xlu0 %67, %v25
    %v69 = vpop.permute.xlu0 %68
    %70 = vset.pattern.permute.xlu0 0
    %71 = vperm.xlu0 %70, %v26
    %v72 = vpop.permute.xlu0 %71
    %73 = vset.pattern.permute.xlu0 0
    %74 = vperm.xlu0 %73, %v27
    %v75 = vpop.permute.xlu0 %74
    %76 = vset.pattern.permute.xlu0 0
    %77 = vperm.xlu0 %76, %v28
    %v78 = vpop.permute.xlu0 %77
    %79 = vset.pattern.permute.xlu0 0
    %80 = vperm.xlu0 %79, %v29
    %v81 = vpop.permute.xlu0 %80
    %82 = vset.pattern.permute.xlu0 0
    %83 = vperm.xlu0 %82, %v30
    %v84 = vpop.permute.xlu0 %83
    %85 = vset.pattern.permute.xlu0 0
    %86 = vperm.xlu0 %85, %v31
    %v87 = vpop.permute.xlu0 %86
    %88 = vset.pattern.permute.xlu0 0
    %89 = vperm.xlu0 %88, %v32
    %v90 = vpop.permute.xlu0 %89
    %91 = vset.pattern.permute.xlu0 0
    %92 = vperm.xlu0 %91, %v33
    %v93 = vpop.permute.xlu0 %92
    %94 = vset.pattern.permute.xlu0 0
    %95 = vperm.xlu0 %94, %v34
    %v96 = vpop.permute.xlu0 %95
    %97 = vset.pattern.permute.xlu0 0
    %98 = vperm.xlu0 %97, %v35
    %v99 = vpop.permute.xlu0 %98
    %100 = vset.pattern.permute.xlu0 0
    %101 = vperm.xlu0 %100, %v36
    %v102 = vpop.permute.xlu0 %101
    %103 = vset.pattern.permute.xlu0 0
    %104 = vperm.xlu0 %103, %v37
    %v105 = vpop.permute.xlu0 %104
    %106 = vset.pattern.permute.xlu0 0
    %107 = vperm.xlu0 %106, %v38
    %v108 = vpop.permute.xlu0 %107
    %109 = vset.pattern.permute.xlu0 0
    %110 = vperm.xlu0 %109, %v39
    %v111 = vpop.permute.xlu0 %110
    %112 = vset.pattern.permute.xlu0 0
    %113 = vperm.xlu0 %112, %v40
    %v114 = vpop.permute.xlu0 %113
    %115 = vset.pattern.permute.xlu0 0
    %116 = vperm.xlu0 %115, %v41
    %v117 = vpop.permute.xlu0 %116
    %118 = vset.pattern.permute.xlu0 0
    %119 = vperm.xlu0 %118, %v42
    %v120 = vpop.permute.xlu0 %119
    %121 = vset.pattern.permute.xlu0 0
    %122 = vperm.xlu0 %121, %v43
    %v123 = vpop.permute.xlu0 %122
    %124 = vset.pattern.permute.xlu0 0
    %125 = vperm.xlu0 %124, %v44
    %v126 = vpop.permute.xlu0 %125
    %127 = vset.pattern.permute.xlu0 0
    %128 = vperm.xlu0 %127, %v45
    %v129 = vpop.permute.xlu0 %128
    %130 = vset.pattern.permute.xlu0 0
    %131 = vperm.xlu0 %130, %v46
    %v132 = vpop.permute.xlu0 %131
    %133 = vset.pattern.permute.xlu0 0
    %134 = vperm.xlu0 %133, %v47
    %v135 = vpop.permute.xlu0 %134
    %136 = vset.pattern.permute.xlu0 0
    %137 = vperm.xlu0 %136, %v48
    %v138 = vpop.permute.xlu0 %137
    %139 = vset.pattern.permute.xlu0 0
    %140 = vperm.xlu0 %139, %v49
    %v141 = vpop.permute.xlu0 %140
    %142 = vset.pattern.permute.xlu0 0
    %143 = vperm.xlu0 %142, %v50
    %v144 = vpop.permute.xlu0 %143
    %145 = vset.pattern.permute.xlu0 0
    %146 = vperm.xlu0 %145, %v51
    %v147 = vpop.permute.xlu0 %146
    %vm148 = vcmp.eq.s32.totalorder %v19, %v54
    %vm149 = vcmp.eq.s32.totalorder %v19, %v57
    %vm150 = vcmp.eq.s32.totalorder %v19, %v60
    %vm151 = vcmp.eq.s32.totalorder %v19, %v63
    %vm152 = vcmp.eq.s32.totalorder %v19, %v66
    %vm153 = vcmp.eq.s32.totalorder %v19, %v69
    %vm154 = vcmp.eq.s32.totalorder %v19, %v72
    %vm155 = vcmp.eq.s32.totalorder %v19, %v75
    %vm156 = vcmp.eq.s32.totalorder %v19, %v78
    %vm157 = vcmp.eq.s32.totalorder %v19, %v81
    %vm158 = vcmp.eq.s32.totalorder %v19, %v84
    %vm159 = vcmp.eq.s32.totalorder %v19, %v87
    %vm160 = vcmp.eq.s32.totalorder %v19, %v90
    %vm161 = vcmp.eq.s32.totalorder %v19, %v93
    %vm162 = vcmp.eq.s32.totalorder %v19, %v96
    %vm163 = vcmp.eq.s32.totalorder %v19, %v99
    %vm164 = vcmp.eq.s32.totalorder %v19, %v102
    %vm165 = vcmp.eq.s32.totalorder %v19, %v105
    %vm166 = vcmp.eq.s32.totalorder %v19, %v108
    %vm167 = vcmp.eq.s32.totalorder %v19, %v111
    %vm168 = vcmp.eq.s32.totalorder %v19, %v114
    %vm169 = vcmp.eq.s32.totalorder %v19, %v117
    %vm170 = vcmp.eq.s32.totalorder %v19, %v120
    %vm171 = vcmp.eq.s32.totalorder %v19, %v123
    %vm172 = vcmp.eq.s32.totalorder %v19, %v126
    %vm173 = vcmp.eq.s32.totalorder %v19, %v129
    %vm174 = vcmp.eq.s32.totalorder %v19, %v132
    %vm175 = vcmp.eq.s32.totalorder %v19, %v135
    %vm176 = vcmp.eq.s32.totalorder %v19, %v138
    %vm177 = vcmp.eq.s32.totalorder %v19, %v141
    %vm178 = vcmp.eq.s32.totalorder %v19, %v144
    %vm179 = vcmp.eq.s32.totalorder %v19, %v147
    %v180 = vsel %vm148, 1, 0
    %v181 = vsel %vm149, 1, 0
    %v182 = vsel %vm150, 1, 0
    %v183 = vsel %vm151, 1, 0
    %v184 = vsel %vm152, 1, 0
    %v185 = vsel %vm153, 1, 0
    %v186 = vsel %vm154, 1, 0
    %v187 = vsel %vm155, 1, 0
    %v188 = vsel %vm156, 1, 0
    %v189 = vsel %vm157, 1, 0
    %v190 = vsel %vm158, 1, 0
    %v191 = vsel %vm159, 1, 0
    %v192 = vsel %vm160, 1, 0
    %v193 = vsel %vm161, 1, 0
    %v194 = vsel %vm162, 1, 0
    %v195 = vsel %vm163, 1, 0
    %v196 = vsel %vm164, 1, 0
    %v197 = vsel %vm165, 1, 0
    %v198 = vsel %vm166, 1, 0
    %v199 = vsel %vm167, 1, 0
    %v200 = vsel %vm168, 1, 0
    %v201 = vsel %vm169, 1, 0
    %v202 = vsel %vm170, 1, 0
    %v203 = vsel %vm171, 1, 0
    %v204 = vsel %vm172, 1, 0
    %v205 = vsel %vm173, 1, 0
    %v206 = vsel %vm174, 1, 0
    %v207 = vsel %vm175, 1, 0
    %v208 = vsel %vm176, 1, 0
    %v209 = vsel %vm177, 1, 0
    %v210 = vsel %vm178, 1, 0
    %v211 = vsel %vm179, 1, 0
    %v212 = vcvt.s32.f32 %v180
    %v213 = vcvt.s32.f32 %v181
    %v214 = vcvt.s32.f32 %v182
    %v215 = vcvt.s32.f32 %v183
    %v216 = vcvt.s32.f32 %v184
    %v217 = vcvt.s32.f32 %v185
    %v218 = vcvt.s32.f32 %v186
    %v219 = vcvt.s32.f32 %v187
    %v220 = vcvt.s32.f32 %v188
    %v221 = vcvt.s32.f32 %v189
    %v222 = vcvt.s32.f32 %v190
    %v223 = vcvt.s32.f32 %v191
    %v224 = vcvt.s32.f32 %v192
    %v225 = vcvt.s32.f32 %v193
    %v226 = vcvt.s32.f32 %v194
    %v227 = vcvt.s32.f32 %v195
    %v228 = vcvt.s32.f32 %v196
    %v229 = vcvt.s32.f32 %v197
    %v230 = vcvt.s32.f32 %v198
    %v231 = vcvt.s32.f32 %v199
    %v232 = vcvt.s32.f32 %v200
    %v233 = vcvt.s32.f32 %v201
    %v234 = vcvt.s32.f32 %v202
    %v235 = vcvt.s32.f32 %v203
    %v236 = vcvt.s32.f32 %v204
    %v237 = vcvt.s32.f32 %v205
    %v238 = vcvt.s32.f32 %v206
    %v239 = vcvt.s32.f32 %v207
    %v240 = vcvt.s32.f32 %v208
    %v241 = vcvt.s32.f32 %v209
    %v242 = vcvt.s32.f32 %v210
    %v243 = vcvt.s32.f32 %v211
    %v244 = vld [vmem:[%s2] sm:$0xff]
    %v245 = vld [vmem:[%s2 + $0x8] sm:$0xff]
    %v246 = vld [vmem:[%s2 + $0x10] sm:$0xff]
    %v247 = vld [vmem:[%s2 + $0x18] sm:$0xff]
    %v248 = vld [vmem:[%s2 + $0x20] sm:$0xff]
    %v249 = vld [vmem:[%s2 + $0x28] sm:$0xff]
    %v250 = vld [vmem:[%s2 + $0x30] sm:$0xff]
    %v251 = vld [vmem:[%s2 + $0x38] sm:$0xff]
    %v252 = vld [vmem:[%s2 + $0x40] sm:$0xff]
    %v253 = vld [vmem:[%s2 + $0x48] sm:$0xff]
    %v254 = vld [vmem:[%s2 + $0x50] sm:$0xff]
    %v255 = vld [vmem:[%s2 + $0x58] sm:$0xff]
    %v256 = vld [vmem:[%s2 + $0x60] sm:$0xff]
    %v257 = vld [vmem:[%s2 + $0x68] sm:$0xff]
    %v258 = vld [vmem:[%s2 + $0x70] sm:$0xff]
    %v259 = vld [vmem:[%s2 + $0x78] sm:$0xff]
    %260 = vmatprep.subr.mxu0 0.0
    %261 = vmatpush1.msra.mxu0 %v259
    %262 = vmatprep.subr.mxu0 0.0
    %263 = vmatpush1.msra.mxu0 %v258
    %264 = vmatprep.subr.mxu0 0.0
    %265 = vmatpush1.msra.mxu0 %v257
    %266 = vmatprep.subr.mxu0 0.0
    %267 = vmatpush1.msra.mxu0 %v256
    %268 = vmatprep.subr.mxu0 0.0
    %269 = vmatpush1.msra.mxu0 %v255
    %270 = vmatprep.subr.mxu0 0.0
    %271 = vmatpush1.msra.mxu0 %v254
    %272 = vmatprep.subr.mxu0 0.0
    %273 = vmatpush1.msra.mxu0 %v253
    %274 = vmatprep.subr.mxu0 0.0
    %275 = vmatpush1.msra.mxu0 %v252
    %276 = vmatprep.subr.mxu0 0.0
    %277 = vmatpush1.msra.mxu0 %v251
    %278 = vmatprep.subr.mxu0 0.0
    %279 = vmatpush1.msra.mxu0 %v250
    %280 = vmatprep.subr.mxu0 0.0
    %281 = vmatpush1.msra.mxu0 %v249
    %282 = vmatprep.subr.mxu0 0.0
    %283 = vmatpush1.msra.mxu0 %v248
    %284 = vmatprep.subr.mxu0 0.0
    %285 = vmatpush1.msra.mxu0 %v247
    %286 = vmatprep.subr.mxu0 0.0
    %287 = vmatpush1.msra.mxu0 %v246
    %288 = vmatprep.subr.mxu0 0.0
    %289 = vmatpush1.msra.mxu0 %v245
    %290 = vmatprep.subr.mxu0 0.0
    %291 = vmatpush1.msra.mxu0 %v244
    %292 = vmatprep.subr.mxu0 0.0
    %293 = vmatpush2.msra.mxu0 0.0
    %294 = vmatprep.subr.mxu0 0.0
    %295 = vmatpush2.msra.mxu0 0.0
    %296 = vmatprep.subr.mxu0 0.0
    %297 = vmatpush2.msra.mxu0 0.0
    %298 = vmatprep.subr.mxu0 0.0
    %299 = vmatpush2.msra.mxu0 0.0
    %300 = vmatprep.subr.mxu0 0.0
    %301 = vmatpush2.msra.mxu0 0.0
    %302 = vmatprep.subr.mxu0 0.0
    %303 = vmatpush2.msra.mxu0 0.0
    %304 = vmatprep.subr.mxu0 0.0
    %305 = vmatpush2.msra.mxu0 0.0
    %306 = vmatprep.subr.mxu0 0.0
    %307 = vmatpush2.msra.mxu0 0.0
    %308 = vmatprep.subr.mxu0 0.0
    %309 = vmatpush2.msra.mxu0 0.0
    %310 = vmatprep.subr.mxu0 0.0
    %311 = vmatpush2.msra.mxu0 0.0
    %312 = vmatprep.subr.mxu0 0.0
    %313 = vmatpush2.msra.mxu0 0.0
    %314 = vmatprep.subr.mxu0 0.0
    %315 = vmatpush2.msra.mxu0 0.0
    %316 = vmatprep.subr.mxu0 0.0
    %317 = vmatpush2.msra.mxu0 0.0
    %318 = vmatprep.subr.mxu0 0.0
    %319 = vmatpush2.msra.mxu0 0.0
    %320 = vmatprep.subr.mxu0 0.0
    %321 = vmatpush2.msra.mxu0 0.0
    %322 = vmatprep.subr.mxu0 0.0
    %323 = vmatpush2.msra.mxu0 0.0
    %324 = vmatprep.mubr.f32.mxu0 0.0
    %325 = vmatmul.mubr.f32.gmra.mxu0 %v212
    %v326 = vpop.f32.mrf.mxu0
    %v327 = vadd.f32 0.0, %v326
    %v328 = vpop.f32.mrf.mxu0
    %329 = vmatprep.mubr.f32.mxu0 0.0
    %330 = vmatmul.mubr.f32.gmra.mxu0 %v213
    %v331 = vpop.f32.mrf.mxu0
    %v332 = vadd.f32 0.0, %v331
    %v333 = vpop.f32.mrf.mxu0
    %334 = vmatprep.mubr.f32.mxu0 0.0
    %335 = vmatmul.mubr.f32.gmra.mxu0 %v214
    %v336 = vpop.f32.mrf.mxu0
    %v337 = vadd.f32 0.0, %v336
    %v338 = vpop.f32.mrf.mxu0
    %339 = vmatprep.mubr.f32.mxu0 0.0
    %340 = vmatmul.mubr.f32.gmra.mxu0 %v215
    %v341 = vpop.f32.mrf.mxu0
    %v342 = vadd.f32 0.0, %v341
    %v343 = vpop.f32.mrf.mxu0
    %344 = vmatprep.mubr.f32.mxu0 0.0
    %345 = vmatmul.mubr.f32.gmra.mxu0 %v216
    %v346 = vpop.f32.mrf.mxu0
    %v347 = vadd.f32 0.0, %v346
    %v348 = vpop.f32.mrf.mxu0
    %349 = vmatprep.mubr.f32.mxu0 0.0
    %350 = vmatmul.mubr.f32.gmra.mxu0 %v217
    %v351 = vpop.f32.mrf.mxu0
    %v352 = vadd.f32 0.0, %v351
    %v353 = vpop.f32.mrf.mxu0
    %354 = vmatprep.mubr.f32.mxu0 0.0
    %355 = vmatmul.mubr.f32.gmra.mxu0 %v218
    %v356 = vpop.f32.mrf.mxu0
    %v357 = vadd.f32 0.0, %v356
    %v358 = vpop.f32.mrf.mxu0
    %359 = vmatprep.mubr.f32.mxu0 0.0
    %360 = vmatmul.mubr.f32.gmra.mxu0 %v219
    %v361 = vpop.f32.mrf.mxu0
    %v362 = vadd.f32 0.0, %v361
    %v363 = vpop.f32.mrf.mxu0
    %364 = vmatprep.mubr.f32.mxu0 0.0
    %365 = vmatmul.mubr.f32.gmra.mxu0 %v220
    %v366 = vpop.f32.mrf.mxu0
    %v367 = vadd.f32 0.0, %v366
    %v368 = vpop.f32.mrf.mxu0
    %369 = vmatprep.mubr.f32.mxu0 0.0
    %370 = vmatmul.mubr.f32.gmra.mxu0 %v221
    %v371 = vpop.f32.mrf.mxu0
    %v372 = vadd.f32 0.0, %v371
    %v373 = vpop.f32.mrf.mxu0
    %374 = vmatprep.mubr.f32.mxu0 0.0
    %375 = vmatmul.mubr.f32.gmra.mxu0 %v222
    %v376 = vpop.f32.mrf.mxu0
    %v377 = vadd.f32 0.0, %v376
    %v378 = vpop.f32.mrf.mxu0
    %379 = vmatprep.mubr.f32.mxu0 0.0
    %380 = vmatmul.mubr.f32.gmra.mxu0 %v223
    %v381 = vpop.f32.mrf.mxu0
    %v382 = vadd.f32 0.0, %v381
    %v383 = vpop.f32.mrf.mxu0
    %384 = vmatprep.mubr.f32.mxu0 0.0
    %385 = vmatmul.mubr.f32.gmra.mxu0 %v224
    %v386 = vpop.f32.mrf.mxu0
    %v387 = vadd.f32 0.0, %v386
    %v388 = vpop.f32.mrf.mxu0
    %389 = vmatprep.mubr.f32.mxu0 0.0
    %390 = vmatmul.mubr.f32.gmra.mxu0 %v225
    %v391 = vpop.f32.mrf.mxu0
    %v392 = vadd.f32 0.0, %v391
    %v393 = vpop.f32.mrf.mxu0
    %394 = vmatprep.mubr.f32.mxu0 0.0
    %395 = vmatmul.mubr.f32.gmra.mxu0 %v226
    %v396 = vpop.f32.mrf.mxu0
    %v397 = vadd.f32 0.0, %v396
    %v398 = vpop.f32.mrf.mxu0
    %399 = vmatprep.mubr.f32.mxu0 0.0
    %400 = vmatmul.mubr.f32.gmra.mxu0 %v227
    %v401 = vpop.f32.mrf.mxu0
    %v402 = vadd.f32 0.0, %v401
    %v403 = vpop.f32.mrf.mxu0
    %404 = vmatprep.mubr.f32.mxu0 0.0
    %405 = vmatmul.mubr.f32.gmra.mxu0 %v228
    %v406 = vpop.f32.mrf.mxu0
    %v407 = vadd.f32 0.0, %v406
    %v408 = vpop.f32.mrf.mxu0
    %409 = vmatprep.mubr.f32.mxu0 0.0
    %410 = vmatmul.mubr.f32.gmra.mxu0 %v229
    %v411 = vpop.f32.mrf.mxu0
    %v412 = vadd.f32 0.0, %v411
    %v413 = vpop.f32.mrf.mxu0
    %414 = vmatprep.mubr.f32.mxu0 0.0
    %415 = vmatmul.mubr.f32.gmra.mxu0 %v230
    %v416 = vpop.f32.mrf.mxu0
    %v417 = vadd.f32 0.0, %v416
    %v418 = vpop.f32.mrf.mxu0
    %419 = vmatprep.mubr.f32.mxu0 0.0
    %420 = vmatmul.mubr.f32.gmra.mxu0 %v231
    %v421 = vpop.f32.mrf.mxu0
    %v422 = vadd.f32 0.0, %v421
    %v423 = vpop.f32.mrf.mxu0
    %424 = vmatprep.mubr.f32.mxu0 0.0
    %425 = vmatmul.mubr.f32.gmra.mxu0 %v232
    %v426 = vpop.f32.mrf.mxu0
    %v427 = vadd.f32 0.0, %v426
    %v428 = vpop.f32.mrf.mxu0
    %429 = vmatprep.mubr.f32.mxu0 0.0
    %430 = vmatmul.mubr.f32.gmra.mxu0 %v233
    %v431 = vpop.f32.mrf.mxu0
    %v432 = vadd.f32 0.0, %v431
    %v433 = vpop.f32.mrf.mxu0
    %434 = vmatprep.mubr.f32.mxu0 0.0
    %435 = vmatmul.mubr.f32.gmra.mxu0 %v234
    %v436 = vpop.f32.mrf.mxu0
    %v437 = vadd.f32 0.0, %v436
    %v438 = vpop.f32.mrf.mxu0
    %439 = vmatprep.mubr.f32.mxu0 0.0
    %440 = vmatmul.mubr.f32.gmra.mxu0 %v235
    %v441 = vpop.f32.mrf.mxu0
    %v442 = vadd.f32 0.0, %v441
    %v443 = vpop.f32.mrf.mxu0
    %444 = vmatprep.mubr.f32.mxu0 0.0
    %445 = vmatmul.mubr.f32.gmra.mxu0 %v236
    %v446 = vpop.f32.mrf.mxu0
    %v447 = vadd.f32 0.0, %v446
    %v448 = vpop.f32.mrf.mxu0
    %449 = vmatprep.mubr.f32.mxu0 0.0
    %450 = vmatmul.mubr.f32.gmra.mxu0 %v237
    %v451 = vpop.f32.mrf.mxu0
    %v452 = vadd.f32 0.0, %v451
    %v453 = vpop.f32.mrf.mxu0
    %454 = vmatprep.mubr.f32.mxu0 0.0
    %455 = vmatmul.mubr.f32.gmra.mxu0 %v238
    %v456 = vpop.f32.mrf.mxu0
    %v457 = vadd.f32 0.0, %v456
    %v458 = vpop.f32.mrf.mxu0
    %459 = vmatprep.mubr.f32.mxu0 0.0
    %460 = vmatmul.mubr.f32.gmra.mxu0 %v239
    %v461 = vpop.f32.mrf.mxu0
    %v462 = vadd.f32 0.0, %v461
    %v463 = vpop.f32.mrf.mxu0
    %464 = vmatprep.mubr.f32.mxu0 0.0
    %465 = vmatmul.mubr.f32.gmra.mxu0 %v240
    %v466 = vpop.f32.mrf.mxu0
    %v467 = vadd.f32 0.0, %v466
    %v468 = vpop.f32.mrf.mxu0
    %469 = vmatprep.mubr.f32.mxu0 0.0
    %470 = vmatmul.mubr.f32.gmra.mxu0 %v241
    %v471 = vpop.f32.mrf.mxu0
    %v472 = vadd.f32 0.0, %v471
    %v473 = vpop.f32.mrf.mxu0
    %474 = vmatprep.mubr.f32.mxu0 0.0
    %475 = vmatmul.mubr.f32.gmra.mxu0 %v242
    %v476 = vpop.f32.mrf.mxu0
    %v477 = vadd.f32 0.0, %v476
    %v478 = vpop.f32.mrf.mxu0
    %479 = vmatprep.mubr.f32.mxu0 0.0
    %480 = vmatmul.mubr.f32.gmra.mxu0 %v243
    %v481 = vpop.f32.mrf.mxu0
    %v482 = vadd.f32 0.0, %v481
    %v483 = vpop.f32.mrf.mxu0
    %484 = vdwg.mxu0
    %485 = vst [vmem:[#allocation2] sm:$0xff] %v327
    %486 = vst [vmem:[#allocation2 + $0x8] sm:$0xff] %v332
    %487 = vst [vmem:[#allocation2 + $0x10] sm:$0xff] %v337
    %488 = vst [vmem:[#allocation2 + $0x18] sm:$0xff] %v342
    %489 = vst [vmem:[#allocation2 + $0x20] sm:$0xff] %v347
    %490 = vst [vmem:[#allocation2 + $0x28] sm:$0xff] %v352
    %491 = vst [vmem:[#allocation2 + $0x30] sm:$0xff] %v357
    %492 = vst [vmem:[#allocation2 + $0x38] sm:$0xff] %v362
    %493 = vst [vmem:[#allocation2 + $0x40] sm:$0xff] %v367
    %494 = vst [vmem:[#allocation2 + $0x48] sm:$0xff] %v372
    %495 = vst [vmem:[#allocation2 + $0x50] sm:$0xff] %v377
    %496 = vst [vmem:[#allocation2 + $0x58] sm:$0xff] %v382
    %497 = vst [vmem:[#allocation2 + $0x60] sm:$0xff] %v387
    %498 = vst [vmem:[#allocation2 + $0x68] sm:$0xff] %v392
    %499 = vst [vmem:[#allocation2 + $0x70] sm:$0xff] %v397
    %500 = vst [vmem:[#allocation2 + $0x78] sm:$0xff] %v402
    %501 = vst [vmem:[#allocation2 + $0x80] sm:$0xff] %v407
    %502 = vst [vmem:[#allocation2 + $0x88] sm:$0xff] %v412
    %503 = vst [vmem:[#allocation2 + $0x90] sm:$0xff] %v417
    %504 = vst [vmem:[#allocation2 + $0x98] sm:$0xff] %v422
    %505 = vst [vmem:[#allocation2 + $0xa0] sm:$0xff] %v427
    %506 = vst [vmem:[#allocation2 + $0xa8] sm:$0xff] %v432
    %507 = vst [vmem:[#allocation2 + $0xb0] sm:$0xff] %v437
    %508 = vst [vmem:[#allocation2 + $0xb8] sm:$0xff] %v442
    %509 = vst [vmem:[#allocation2 + $0xc0] sm:$0xff] %v447
    %510 = vst [vmem:[#allocation2 + $0xc8] sm:$0xff] %v452
    %511 = vst [vmem:[#allocation2 + $0xd0] sm:$0xff] %v457
    %512 = vst [vmem:[#allocation2 + $0xd8] sm:$0xff] %v462
    %513 = vst [vmem:[#allocation2 + $0xe0] sm:$0xff] %v467
    %514 = vst [vmem:[#allocation2 + $0xe8] sm:$0xff] %v472
    %515 = vst [vmem:[#allocation2 + $0xf0] sm:$0xff] %v477
    %516 = vst [vmem:[#allocation2 + $0xf8] sm:$0xff] %v482
    %517 = vmax.xlane.f32.xlu0 %v327
    %v518 = vpop.xlane.xlu0 %517
    %519 = vmax.xlane.f32.xlu0 %v332
    %v520 = vpop.xlane.xlu0 %519
    %521 = vmax.xlane.f32.xlu0 %v337
    %v522 = vpop.xlane.xlu0 %521
    %523 = vmax.xlane.f32.xlu0 %v342
    %v524 = vpop.xlane.xlu0 %523
    %525 = vmax.xlane.f32.xlu0 %v347
    %v526 = vpop.xlane.xlu0 %525
    %527 = vmax.xlane.f32.xlu0 %v352
    %v528 = vpop.xlane.xlu0 %527
    %529 = vmax.xlane.f32.xlu0 %v357
    %v530 = vpop.xlane.xlu0 %529
    %531 = vmax.xlane.f32.xlu0 %v362
    %v532 = vpop.xlane.xlu0 %531
    %533 = vmax.xlane.f32.xlu0 %v367
    %v534 = vpop.xlane.xlu0 %533
    %535 = vmax.xlane.f32.xlu0 %v372
    %v536 = vpop.xlane.xlu0 %535
    %537 = vmax.xlane.f32.xlu0 %v377
    %v538 = vpop.xlane.xlu0 %537
    %539 = vmax.xlane.f32.xlu0 %v382
    %v540 = vpop.xlane.xlu0 %539
    %541 = vmax.xlane.f32.xlu0 %v387
    %v542 = vpop.xlane.xlu0 %541
    %543 = vmax.xlane.f32.xlu0 %v392
    %v544 = vpop.xlane.xlu0 %543
    %545 = vmax.xlane.f32.xlu0 %v397
    %v546 = vpop.xlane.xlu0 %545
    %547 = vmax.xlane.f32.xlu0 %v402
    %v548 = vpop.xlane.xlu0 %547
    %549 = vmax.xlane.f32.xlu0 %v407
    %v550 = vpop.xlane.xlu0 %549
    %551 = vmax.xlane.f32.xlu0 %v412
    %v552 = vpop.xlane.xlu0 %551
    %553 = vmax.xlane.f32.xlu0 %v417
    %v554 = vpop.xlane.xlu0 %553
    %555 = vmax.xlane.f32.xlu0 %v422
    %v556 = vpop.xlane.xlu0 %555
    %557 = vmax.xlane.f32.xlu0 %v427
    %v558 = vpop.xlane.xlu0 %557
    %559 = vmax.xlane.f32.xlu0 %v432
    %v560 = vpop.xlane.xlu0 %559
    %561 = vmax.xlane.f32.xlu0 %v437
    %v562 = vpop.xlane.xlu0 %561
    %563 = vmax.xlane.f32.xlu0 %v442
    %v564 = vpop.xlane.xlu0 %563
    %565 = vmax.xlane.f32.xlu0 %v447
    %v566 = vpop.xlane.xlu0 %565
    %567 = vmax.xlane.f32.xlu0 %v452
    %v568 = vpop.xlane.xlu0 %567
    %569 = vmax.xlane.f32.xlu0 %v457
    %v570 = vpop.xlane.xlu0 %569
    %571 = vmax.xlane.f32.xlu0 %v462
    %v572 = vpop.xlane.xlu0 %571
    %573 = vmax.xlane.f32.xlu0 %v467
    %v574 = vpop.xlane.xlu0 %573
    %575 = vmax.xlane.f32.xlu0 %v472
    %v576 = vpop.xlane.xlu0 %575
    %577 = vmax.xlane.f32.xlu0 %v477
    %v578 = vpop.xlane.xlu0 %577
    %579 = vmax.xlane.f32.xlu0 %v482
    %v580 = vpop.xlane.xlu0 %579
    %v581 = vsub.f32 %v327, %v518
    %v582 = vsub.f32 %v332, %v520
    %v583 = vsub.f32 %v337, %v522
    %v584 = vsub.f32 %v342, %v524
    %v585 = vsub.f32 %v347, %v526
    %v586 = vsub.f32 %v352, %v528
    %v587 = vsub.f32 %v357, %v530
    %v588 = vsub.f32 %v362, %v532
    %v589 = vsub.f32 %v367, %v534
    %v590 = vsub.f32 %v372, %v536
    %v591 = vsub.f32 %v377, %v538
    %v592 = vsub.f32 %v382, %v540
    %v593 = vsub.f32 %v387, %v542
    %v594 = vsub.f32 %v392, %v544
    %v595 = vsub.f32 %v397, %v546
    %v596 = vsub.f32 %v402, %v548
    %v597 = vsub.f32 %v407, %v550
    %v598 = vsub.f32 %v412, %v552
    %v599 = vsub.f32 %v417, %v554
    %v600 = vsub.f32 %v422, %v556
    %v601 = vsub.f32 %v427, %v558
    %v602 = vsub.f32 %v432, %v560
    %v603 = vsub.f32 %v437, %v562
    %v604 = vsub.f32 %v442, %v564
    %v605 = vsub.f32 %v447, %v566
    %v606 = vsub.f32 %v452, %v568
    %v607 = vsub.f32 %v457, %v570
    %v608 = vsub.f32 %v462, %v572
    %v609 = vsub.f32 %v467, %v574
    %v610 = vsub.f32 %v472, %v576
    %v611 = vsub.f32 %v477, %v578
    %v612 = vsub.f32 %v482, %v580
    %v613 = vmul.f32 %v581, 1.442695
    %v614 = vpow.pop %v613
    %v615 = vmul.f32 %v582, 1.442695
    %v616 = vpow.pop %v615
    %v617 = vmul.f32 %v583, 1.442695
    %v618 = vpow.pop %v617
    %v619 = vmul.f32 %v584, 1.442695
    %v620 = vpow.pop %v619
    %v621 = vmul.f32 %v585, 1.442695
    %v622 = vpow.pop %v621
    %v623 = vmul.f32 %v586, 1.442695
    %v624 = vpow.pop %v623
    %v625 = vmul.f32 %v587, 1.442695
    %v626 = vpow.pop %v625
    %v627 = vmul.f32 %v588, 1.442695
    %v628 = vpow.pop %v627
    %v629 = vmul.f32 %v589, 1.442695
    %v630 = vpow.pop %v629
    %v631 = vmul.f32 %v590, 1.442695
    %v632 = vpow.pop %v631
    %v633 = vmul.f32 %v591, 1.442695
    %v634 = vpow.pop %v633
    %v635 = vmul.f32 %v592, 1.442695
    %v636 = vpow.pop %v635
    %v637 = vmul.f32 %v593, 1.442695
    %v638 = vpow.pop %v637
    %v639 = vmul.f32 %v594, 1.442695
    %v640 = vpow.pop %v639
    %v641 = vmul.f32 %v595, 1.442695
    %v642 = vpow.pop %v641
    %v643 = vmul.f32 %v596, 1.442695
    %v644 = vpow.pop %v643
    %v645 = vmul.f32 %v597, 1.442695
    %v646 = vpow.pop %v645
    %v647 = vmul.f32 %v598, 1.442695
    %v648 = vpow.pop %v647
    %v649 = vmul.f32 %v599, 1.442695
    %v650 = vpow.pop %v649
    %v651 = vmul.f32 %v600, 1.442695
    %v652 = vpow.pop %v651
    %v653 = vmul.f32 %v601, 1.442695
    %v654 = vpow.pop %v653
    %v655 = vmul.f32 %v602, 1.442695
    %v656 = vpow.pop %v655
    %v657 = vmul.f32 %v603, 1.442695
    %v658 = vpow.pop %v657
    %v659 = vmul.f32 %v604, 1.442695
    %v660 = vpow.pop %v659
    %v661 = vmul.f32 %v605, 1.442695
    %v662 = vpow.pop %v661
    %v663 = vmul.f32 %v606, 1.442695
    %v664 = vpow.pop %v663
    %v665 = vmul.f32 %v607, 1.442695
    %v666 = vpow.pop %v665
    %v667 = vmul.f32 %v608, 1.442695
    %v668 = vpow.pop %v667
    %v669 = vmul.f32 %v609, 1.442695
    %v670 = vpow.pop %v669
    %v671 = vmul.f32 %v610, 1.442695
    %v672 = vpow.pop %v671
    %v673 = vmul.f32 %v611, 1.442695
    %v674 = vpow.pop %v673
    %v675 = vmul.f32 %v612, 1.442695
    %v676 = vpow.pop %v675
    %677 = vadd.xlane.f32.xlu0 %v614
    %v678 = vpop.xlane.xlu0 %677
    %679 = vadd.xlane.f32.xlu0 %v616
    %v680 = vpop.xlane.xlu0 %679
    %681 = vadd.xlane.f32.xlu0 %v618
    %v682 = vpop.xlane.xlu0 %681
    %683 = vadd.xlane.f32.xlu0 %v620
    %v684 = vpop.xlane.xlu0 %683
    %685 = vadd.xlane.f32.xlu0 %v622
    %v686 = vpop.xlane.xlu0 %685
    %687 = vadd.xlane.f32.xlu0 %v624
    %v688 = vpop.xlane.xlu0 %687
    %689 = vadd.xlane.f32.xlu0 %v626
    %v690 = vpop.xlane.xlu0 %689
    %691 = vadd.xlane.f32.xlu0 %v628
    %v692 = vpop.xlane.xlu0 %691
    %693 = vadd.xlane.f32.xlu0 %v630
    %v694 = vpop.xlane.xlu0 %693
    %695 = vadd.xlane.f32.xlu0 %v632
    %v696 = vpop.xlane.xlu0 %695
    %697 = vadd.xlane.f32.xlu0 %v634
    %v698 = vpop.xlane.xlu0 %697
    %699 = vadd.xlane.f32.xlu0 %v636
    %v700 = vpop.xlane.xlu0 %699
    %701 = vadd.xlane.f32.xlu0 %v638
    %v702 = vpop.xlane.xlu0 %701
    %703 = vadd.xlane.f32.xlu0 %v640
    %v704 = vpop.xlane.xlu0 %703
    %705 = vadd.xlane.f32.xlu0 %v642
    %v706 = vpop.xlane.xlu0 %705
    %707 = vadd.xlane.f32.xlu0 %v644
    %v708 = vpop.xlane.xlu0 %707
    %709 = vadd.xlane.f32.xlu0 %v646
    %v710 = vpop.xlane.xlu0 %709
    %711 = vadd.xlane.f32.xlu0 %v648
    %v712 = vpop.xlane.xlu0 %711
    %713 = vadd.xlane.f32.xlu0 %v650
    %v714 = vpop.xlane.xlu0 %713
    %715 = vadd.xlane.f32.xlu0 %v652
    %v716 = vpop.xlane.xlu0 %715
    %717 = vadd.xlane.f32.xlu0 %v654
    %v718 = vpop.xlane.xlu0 %717
    %719 = vadd.xlane.f32.xlu0 %v656
    %v720 = vpop.xlane.xlu0 %719
    %721 = vadd.xlane.f32.xlu0 %v658
    %v722 = vpop.xlane.xlu0 %721
    %723 = vadd.xlane.f32.xlu0 %v660
    %v724 = vpop.xlane.xlu0 %723
    %725 = vadd.xlane.f32.xlu0 %v662
    %v726 = vpop.xlane.xlu0 %725
    %727 = vadd.xlane.f32.xlu0 %v664
    %v728 = vpop.xlane.xlu0 %727
    %729 = vadd.xlane.f32.xlu0 %v666
    %v730 = vpop.xlane.xlu0 %729
    %731 = vadd.xlane.f32.xlu0 %v668
    %v732 = vpop.xlane.xlu0 %731
    %733 = vadd.xlane.f32.xlu0 %v670
    %v734 = vpop.xlane.xlu0 %733
    %735 = vadd.xlane.f32.xlu0 %v672
    %v736 = vpop.xlane.xlu0 %735
    %737 = vadd.xlane.f32.xlu0 %v674
    %v738 = vpop.xlane.xlu0 %737
    %739 = vadd.xlane.f32.xlu0 %v676
    %v740 = vpop.xlane.xlu0 %739
    %v741 = vlog2.pop %v678
    %v742 = vmul.f32 %v741, 0.6931472
    %v743 = vlog2.pop %v680
    %v744 = vmul.f32 %v743, 0.6931472
    %v745 = vlog2.pop %v682
    %v746 = vmul.f32 %v745, 0.6931472
    %v747 = vlog2.pop %v684
    %v748 = vmul.f32 %v747, 0.6931472
    %v749 = vlog2.pop %v686
    %v750 = vmul.f32 %v749, 0.6931472
    %v751 = vlog2.pop %v688
    %v752 = vmul.f32 %v751, 0.6931472
    %v753 = vlog2.pop %v690
    %v754 = vmul.f32 %v753, 0.6931472
    %v755 = vlog2.pop %v692
    %v756 = vmul.f32 %v755, 0.6931472
    %v757 = vlog2.pop %v694
    %v758 = vmul.f32 %v757, 0.6931472
    %v759 = vlog2.pop %v696
    %v760 = vmul.f32 %v759, 0.6931472
    %v761 = vlog2.pop %v698
    %v762 = vmul.f32 %v761, 0.6931472
    %v763 = vlog2.pop %v700
    %v764 = vmul.f32 %v763, 0.6931472
    %v765 = vlog2.pop %v702
    %v766 = vmul.f32 %v765, 0.6931472
    %v767 = vlog2.pop %v704
    %v768 = vmul.f32 %v767, 0.6931472
    %v769 = vlog2.pop %v706
    %v770 = vmul.f32 %v769, 0.6931472
    %v771 = vlog2.pop %v708
    %v772 = vmul.f32 %v771, 0.6931472
    %v773 = vlog2.pop %v710
    %v774 = vmul.f32 %v773, 0.6931472
    %v775 = vlog2.pop %v712
    %v776 = vmul.f32 %v775, 0.6931472
    %v777 = vlog2.pop %v714
    %v778 = vmul.f32 %v777, 0.6931472
    %v779 = vlog2.pop %v716
    %v780 = vmul.f32 %v779, 0.6931472
    %v781 = vlog2.pop %v718
    %v782 = vmul.f32 %v781, 0.6931472
    %v783 = vlog2.pop %v720
    %v784 = vmul.f32 %v783, 0.6931472
    %v785 = vlog2.pop %v722
    %v786 = vmul.f32 %v785, 0.6931472
    %v787 = vlog2.pop %v724
    %v788 = vmul.f32 %v787, 0.6931472
    %v789 = vlog2.pop %v726
    %v790 = vmul.f32 %v789, 0.6931472
    %v791 = vlog2.pop %v728
    %v792 = vmul.f32 %v791, 0.6931472
    %v793 = vlog2.pop %v730
    %v794 = vmul.f32 %v793, 0.6931472
    %v795 = vlog2.pop %v732
    %v796 = vmul.f32 %v795, 0.6931472
    %v797 = vlog2.pop %v734
    %v798 = vmul.f32 %v797, 0.6931472
    %v799 = vlog2.pop %v736
    %v800 = vmul.f32 %v799, 0.6931472
    %v801 = vlog2.pop %v738
    %v802 = vmul.f32 %v801, 0.6931472
    %v803 = vlog2.pop %v740
    %v804 = vmul.f32 %v803, 0.6931472
    %v805 = vadd.f32 %v518, %v742
    %v806 = vadd.f32 %v520, %v744
    %v807 = vadd.f32 %v522, %v746
    %v808 = vadd.f32 %v524, %v748
    %v809 = vadd.f32 %v526, %v750
    %v810 = vadd.f32 %v528, %v752
    %v811 = vadd.f32 %v530, %v754
    %v812 = vadd.f32 %v532, %v756
    %v813 = vadd.f32 %v534, %v758
    %v814 = vadd.f32 %v536, %v760
    %v815 = vadd.f32 %v538, %v762
    %v816 = vadd.f32 %v540, %v764
    %v817 = vadd.f32 %v542, %v766
    %v818 = vadd.f32 %v544, %v768
    %v819 = vadd.f32 %v546, %v770
    %v820 = vadd.f32 %v548, %v772
    %v821 = vadd.f32 %v550, %v774
    %v822 = vadd.f32 %v552, %v776
    %v823 = vadd.f32 %v554, %v778
    %v824 = vadd.f32 %v556, %v780
    %v825 = vadd.f32 %v558, %v782
    %v826 = vadd.f32 %v560, %v784
    %v827 = vadd.f32 %v562, %v786
    %v828 = vadd.f32 %v564, %v788
    %v829 = vadd.f32 %v566, %v790
    %v830 = vadd.f32 %v568, %v792
    %v831 = vadd.f32 %v570, %v794
    %v832 = vadd.f32 %v572, %v796
    %v833 = vadd.f32 %v574, %v798
    %v834 = vadd.f32 %v576, %v800
    %v835 = vadd.f32 %v578, %v802
    %v836 = vadd.f32 %v580, %v804
    %v837 = vld [vmem:[%s1] sm:$0xff]
    %v838 = vld [vmem:[%s1 + $0x8] sm:$0xff]
    %v839 = vld [vmem:[%s1 + $0x10] sm:$0xff]
    %v840 = vld [vmem:[%s1 + $0x18] sm:$0xff]
    %v841 = vld [vmem:[%s1 + $0x20] sm:$0xff]
    %v842 = vld [vmem:[%s1 + $0x28] sm:$0xff]
    %v843 = vld [vmem:[%s1 + $0x30] sm:$0xff]
    %v844 = vld [vmem:[%s1 + $0x38] sm:$0xff]
    %v845 = vld [vmem:[%s1 + $0x40] sm:$0xff]
    %v846 = vld [vmem:[%s1 + $0x48] sm:$0xff]
    %v847 = vld [vmem:[%s1 + $0x50] sm:$0xff]
    %v848 = vld [vmem:[%s1 + $0x58] sm:$0xff]
    %v849 = vld [vmem:[%s1 + $0x60] sm:$0xff]
    %v850 = vld [vmem:[%s1 + $0x68] sm:$0xff]
    %v851 = vld [vmem:[%s1 + $0x70] sm:$0xff]
    %v852 = vld [vmem:[%s1 + $0x78] sm:$0xff]
    %v853 = vld [vmem:[%s1 + $0x80] sm:$0xff]
    %v854 = vld [vmem:[%s1 + $0x88] sm:$0xff]
    %v855 = vld [vmem:[%s1 + $0x90] sm:$0xff]
    %v856 = vld [vmem:[%s1 + $0x98] sm:$0xff]
    %v857 = vld [vmem:[%s1 + $0xa0] sm:$0xff]
    %v858 = vld [vmem:[%s1 + $0xa8] sm:$0xff]
    %v859 = vld [vmem:[%s1 + $0xb0] sm:$0xff]
    %v860 = vld [vmem:[%s1 + $0xb8] sm:$0xff]
    %v861 = vld [vmem:[%s1 + $0xc0] sm:$0xff]
    %v862 = vld [vmem:[%s1 + $0xc8] sm:$0xff]
    %v863 = vld [vmem:[%s1 + $0xd0] sm:$0xff]
    %v864 = vld [vmem:[%s1 + $0xd8] sm:$0xff]
    %v865 = vld [vmem:[%s1 + $0xe0] sm:$0xff]
    %v866 = vld [vmem:[%s1 + $0xe8] sm:$0xff]
    %v867 = vld [vmem:[%s1 + $0xf0] sm:$0xff]
    %v868 = vld [vmem:[%s1 + $0xf8] sm:$0xff]
    %869 = vset.pattern.permute.xlu0 0
    %870 = vperm.xlu0 %869, %v837
    %v871 = vpop.permute.xlu0 %870
    %872 = vset.pattern.permute.xlu0 0
    %873 = vperm.xlu0 %872, %v838
    %v874 = vpop.permute.xlu0 %873
    %875 = vset.pattern.permute.xlu0 0
    %876 = vperm.xlu0 %875, %v839
    %v877 = vpop.permute.xlu0 %876
    %878 = vset.pattern.permute.xlu0 0
    %879 = vperm.xlu0 %878, %v840
    %v880 = vpop.permute.xlu0 %879
    %881 = vset.pattern.permute.xlu0 0
    %882 = vperm.xlu0 %881, %v841
    %v883 = vpop.permute.xlu0 %882
    %884 = vset.pattern.permute.xlu0 0
    %885 = vperm.xlu0 %884, %v842
    %v886 = vpop.permute.xlu0 %885
    %887 = vset.pattern.permute.xlu0 0
    %888 = vperm.xlu0 %887, %v843
    %v889 = vpop.permute.xlu0 %888
    %890 = vset.pattern.permute.xlu0 0
    %891 = vperm.xlu0 %890, %v844
    %v892 = vpop.permute.xlu0 %891
    %893 = vset.pattern.permute.xlu0 0
    %894 = vperm.xlu0 %893, %v845
    %v895 = vpop.permute.xlu0 %894
    %896 = vset.pattern.permute.xlu0 0
    %897 = vperm.xlu0 %896, %v846
    %v898 = vpop.permute.xlu0 %897
    %899 = vset.pattern.permute.xlu0 0
    %900 = vperm.xlu0 %899, %v847
    %v901 = vpop.permute.xlu0 %900
    %902 = vset.pattern.permute.xlu0 0
    %903 = vperm.xlu0 %902, %v848
    %v904 = vpop.permute.xlu0 %903
    %905 = vset.pattern.permute.xlu0 0
    %906 = vperm.xlu0 %905, %v849
    %v907 = vpop.permute.xlu0 %906
    %908 = vset.pattern.permute.xlu0 0
    %909 = vperm.xlu0 %908, %v850
    %v910 = vpop.permute.xlu0 %909
    %911 = vset.pattern.permute.xlu0 0
    %912 = vperm.xlu0 %911, %v851
    %v913 = vpop.permute.xlu0 %912
    %914 = vset.pattern.permute.xlu0 0
    %915 = vperm.xlu0 %914, %v852
    %v916 = vpop.permute.xlu0 %915
    %917 = vset.pattern.permute.xlu0 0
    %918 = vperm.xlu0 %917, %v853
    %v919 = vpop.permute.xlu0 %918
    %920 = vset.pattern.permute.xlu0 0
    %921 = vperm.xlu0 %920, %v854
    %v922 = vpop.permute.xlu0 %921
    %923 = vset.pattern.permute.xlu0 0
    %924 = vperm.xlu0 %923, %v855
    %v925 = vpop.permute.xlu0 %924
    %926 = vset.pattern.permute.xlu0 0
    %927 = vperm.xlu0 %926, %v856
    %v928 = vpop.permute.xlu0 %927
    %929 = vset.pattern.permute.xlu0 0
    %930 = vperm.xlu0 %929, %v857
    %v931 = vpop.permute.xlu0 %930
    %932 = vset.pattern.permute.xlu0 0
    %933 = vperm.xlu0 %932, %v858
    %v934 = vpop.permute.xlu0 %933
    %935 = vset.pattern.permute.xlu0 0
    %936 = vperm.xlu0 %935, %v859
    %v937 = vpop.permute.xlu0 %936
    %938 = vset.pattern.permute.xlu0 0
    %939 = vperm.xlu0 %938, %v860
    %v940 = vpop.permute.xlu0 %939
    %941 = vset.pattern.permute.xlu0 0
    %942 = vperm.xlu0 %941, %v861
    %v943 = vpop.permute.xlu0 %942
    %944 = vset.pattern.permute.xlu0 0
    %945 = vperm.xlu0 %944, %v862
    %v946 = vpop.permute.xlu0 %945
    %947 = vset.pattern.permute.xlu0 0
    %948 = vperm.xlu0 %947, %v863
    %v949 = vpop.permute.xlu0 %948
    %950 = vset.pattern.permute.xlu0 0
    %951 = vperm.xlu0 %950, %v864
    %v952 = vpop.permute.xlu0 %951
    %953 = vset.pattern.permute.xlu0 0
    %954 = vperm.xlu0 %953, %v865
    %v955 = vpop.permute.xlu0 %954
    %956 = vset.pattern.permute.xlu0 0
    %957 = vperm.xlu0 %956, %v866
    %v958 = vpop.permute.xlu0 %957
    %959 = vset.pattern.permute.xlu0 0
    %960 = vperm.xlu0 %959, %v867
    %v961 = vpop.permute.xlu0 %960
    %962 = vset.pattern.permute.xlu0 0
    %963 = vperm.xlu0 %962, %v868
    %v964 = vpop.permute.xlu0 %963
    %vm965 = vcmp.eq.s32.totalorder %v19, %v871
    %vm966 = vcmp.eq.s32.totalorder %v19, %v874
    %vm967 = vcmp.eq.s32.totalorder %v19, %v877
    %vm968 = vcmp.eq.s32.totalorder %v19, %v880
    %vm969 = vcmp.eq.s32.totalorder %v19, %v883
    %vm970 = vcmp.eq.s32.totalorder %v19, %v886
    %vm971 = vcmp.eq.s32.totalorder %v19, %v889
    %vm972 = vcmp.eq.s32.totalorder %v19, %v892
    %vm973 = vcmp.eq.s32.totalorder %v19, %v895
    %vm974 = vcmp.eq.s32.totalorder %v19, %v898
    %vm975 = vcmp.eq.s32.totalorder %v19, %v901
    %vm976 = vcmp.eq.s32.totalorder %v19, %v904
    %vm977 = vcmp.eq.s32.totalorder %v19, %v907
    %vm978 = vcmp.eq.s32.totalorder %v19, %v910
    %vm979 = vcmp.eq.s32.totalorder %v19, %v913
    %vm980 = vcmp.eq.s32.totalorder %v19, %v916
    %vm981 = vcmp.eq.s32.totalorder %v19, %v919
    %vm982 = vcmp.eq.s32.totalorder %v19, %v922
    %vm983 = vcmp.eq.s32.totalorder %v19, %v925
    %vm984 = vcmp.eq.s32.totalorder %v19, %v928
    %vm985 = vcmp.eq.s32.totalorder %v19, %v931
    %vm986 = vcmp.eq.s32.totalorder %v19, %v934
    %vm987 = vcmp.eq.s32.totalorder %v19, %v937
    %vm988 = vcmp.eq.s32.totalorder %v19, %v940
    %vm989 = vcmp.eq.s32.totalorder %v19, %v943
    %vm990 = vcmp.eq.s32.totalorder %v19, %v946
    %vm991 = vcmp.eq.s32.totalorder %v19, %v949
    %vm992 = vcmp.eq.s32.totalorder %v19, %v952
    %vm993 = vcmp.eq.s32.totalorder %v19, %v955
    %vm994 = vcmp.eq.s32.totalorder %v19, %v958
    %vm995 = vcmp.eq.s32.totalorder %v19, %v961
    %vm996 = vcmp.eq.s32.totalorder %v19, %v964
    %v997 = vsel %vm965, 1, 0
    %v998 = vsel %vm966, 1, 0
    %v999 = vsel %vm967, 1, 0
    %v1000 = vsel %vm968, 1, 0
    %v1001 = vsel %vm969, 1, 0
    %v1002 = vsel %vm970, 1, 0
    %v1003 = vsel %vm971, 1, 0
    %v1004 = vsel %vm972, 1, 0
    %v1005 = vsel %vm973, 1, 0
    %v1006 = vsel %vm974, 1, 0
    %v1007 = vsel %vm975, 1, 0
    %v1008 = vsel %vm976, 1, 0
    %v1009 = vsel %vm977, 1, 0
    %v1010 = vsel %vm978, 1, 0
    %v1011 = vsel %vm979, 1, 0
    %v1012 = vsel %vm980, 1, 0
    %v1013 = vsel %vm981, 1, 0
    %v1014 = vsel %vm982, 1, 0
    %v1015 = vsel %vm983, 1, 0
    %v1016 = vsel %vm984, 1, 0
    %v1017 = vsel %vm985, 1, 0
    %v1018 = vsel %vm986, 1, 0
    %v1019 = vsel %vm987, 1, 0
    %v1020 = vsel %vm988, 1, 0
    %v1021 = vsel %vm989, 1, 0
    %v1022 = vsel %vm990, 1, 0
    %v1023 = vsel %vm991, 1, 0
    %v1024 = vsel %vm992, 1, 0
    %v1025 = vsel %vm993, 1, 0
    %v1026 = vsel %vm994, 1, 0
    %v1027 = vsel %vm995, 1, 0
    %v1028 = vsel %vm996, 1, 0
    %v1029 = vcvt.s32.f32 %v997
    %v1030 = vcvt.s32.f32 %v998
    %v1031 = vcvt.s32.f32 %v999
    %v1032 = vcvt.s32.f32 %v1000
    %v1033 = vcvt.s32.f32 %v1001
    %v1034 = vcvt.s32.f32 %v1002
    %v1035 = vcvt.s32.f32 %v1003
    %v1036 = vcvt.s32.f32 %v1004
    %v1037 = vcvt.s32.f32 %v1005
    %v1038 = vcvt.s32.f32 %v1006
    %v1039 = vcvt.s32.f32 %v1007
    %v1040 = vcvt.s32.f32 %v1008
    %v1041 = vcvt.s32.f32 %v1009
    %v1042 = vcvt.s32.f32 %v1010
    %v1043 = vcvt.s32.f32 %v1011
    %v1044 = vcvt.s32.f32 %v1012
    %v1045 = vcvt.s32.f32 %v1013
    %v1046 = vcvt.s32.f32 %v1014
    %v1047 = vcvt.s32.f32 %v1015
    %v1048 = vcvt.s32.f32 %v1016
    %v1049 = vcvt.s32.f32 %v1017
    %v1050 = vcvt.s32.f32 %v1018
    %v1051 = vcvt.s32.f32 %v1019
    %v1052 = vcvt.s32.f32 %v1020
    %v1053 = vcvt.s32.f32 %v1021
    %v1054 = vcvt.s32.f32 %v1022
    %v1055 = vcvt.s32.f32 %v1023
    %v1056 = vcvt.s32.f32 %v1024
    %v1057 = vcvt.s32.f32 %v1025
    %v1058 = vcvt.s32.f32 %v1026
    %v1059 = vcvt.s32.f32 %v1027
    %v1060 = vcvt.s32.f32 %v1028
    %v1061 = vmul.f32 %v1029, %v327
    %v1062 = vmul.f32 %v1030, %v332
    %v1063 = vmul.f32 %v1031, %v337
    %v1064 = vmul.f32 %v1032, %v342
    %v1065 = vmul.f32 %v1033, %v347
    %v1066 = vmul.f32 %v1034, %v352
    %v1067 = vmul.f32 %v1035, %v357
    %v1068 = vmul.f32 %v1036, %v362
    %v1069 = vmul.f32 %v1037, %v367
    %v1070 = vmul.f32 %v1038, %v372
    %v1071 = vmul.f32 %v1039, %v377
    %v1072 = vmul.f32 %v1040, %v382
    %v1073 = vmul.f32 %v1041, %v387
    %v1074 = vmul.f32 %v1042, %v392
    %v1075 = vmul.f32 %v1043, %v397
    %v1076 = vmul.f32 %v1044, %v402
    %v1077 = vmul.f32 %v1045, %v407
    %v1078 = vmul.f32 %v1046, %v412
    %v1079 = vmul.f32 %v1047, %v417
    %v1080 = vmul.f32 %v1048, %v422
    %v1081 = vmul.f32 %v1049, %v427
    %v1082 = vmul.f32 %v1050, %v432
    %v1083 = vmul.f32 %v1051, %v437
    %v1084 = vmul.f32 %v1052, %v442
    %v1085 = vmul.f32 %v1053, %v447
    %v1086 = vmul.f32 %v1054, %v452
    %v1087 = vmul.f32 %v1055, %v457
    %v1088 = vmul.f32 %v1056, %v462
    %v1089 = vmul.f32 %v1057, %v467
    %v1090 = vmul.f32 %v1058, %v472
    %v1091 = vmul.f32 %v1059, %v477
    %v1092 = vmul.f32 %v1060, %v482
    %1093 = vadd.xlane.f32.xlu0 %v1061
    %v1094 = vpop.xlane.xlu0 %1093
    %1095 = vadd.xlane.f32.xlu0 %v1062
    %v1096 = vpop.xlane.xlu0 %1095
    %1097 = vadd.xlane.f32.xlu0 %v1063
    %v1098 = vpop.xlane.xlu0 %1097
    %1099 = vadd.xlane.f32.xlu0 %v1064
    %v1100 = vpop.xlane.xlu0 %1099
    %1101 = vadd.xlane.f32.xlu0 %v1065
    %v1102 = vpop.xlane.xlu0 %1101
    %1103 = vadd.xlane.f32.xlu0 %v1066
    %v1104 = vpop.xlane.xlu0 %1103
    %1105 = vadd.xlane.f32.xlu0 %v1067
    %v1106 = vpop.xlane.xlu0 %1105
    %1107 = vadd.xlane.f32.xlu0 %v1068
    %v1108 = vpop.xlane.xlu0 %1107
    %1109 = vadd.xlane.f32.xlu0 %v1069
    %v1110 = vpop.xlane.xlu0 %1109
    %1111 = vadd.xlane.f32.xlu0 %v1070
    %v1112 = vpop.xlane.xlu0 %1111
    %1113 = vadd.xlane.f32.xlu0 %v1071
    %v1114 = vpop.xlane.xlu0 %1113
    %1115 = vadd.xlane.f32.xlu0 %v1072
    %v1116 = vpop.xlane.xlu0 %1115
    %1117 = vadd.xlane.f32.xlu0 %v1073
    %v1118 = vpop.xlane.xlu0 %1117
    %1119 = vadd.xlane.f32.xlu0 %v1074
    %v1120 = vpop.xlane.xlu0 %1119
    %1121 = vadd.xlane.f32.xlu0 %v1075
    %v1122 = vpop.xlane.xlu0 %1121
    %1123 = vadd.xlane.f32.xlu0 %v1076
    %v1124 = vpop.xlane.xlu0 %1123
    %1125 = vadd.xlane.f32.xlu0 %v1077
    %v1126 = vpop.xlane.xlu0 %1125
    %1127 = vadd.xlane.f32.xlu0 %v1078
    %v1128 = vpop.xlane.xlu0 %1127
    %1129 = vadd.xlane.f32.xlu0 %v1079
    %v1130 = vpop.xlane.xlu0 %1129
    %1131 = vadd.xlane.f32.xlu0 %v1080
    %v1132 = vpop.xlane.xlu0 %1131
    %1133 = vadd.xlane.f32.xlu0 %v1081
    %v1134 = vpop.xlane.xlu0 %1133
    %1135 = vadd.xlane.f32.xlu0 %v1082
    %v1136 = vpop.xlane.xlu0 %1135
    %1137 = vadd.xlane.f32.xlu0 %v1083
    %v1138 = vpop.xlane.xlu0 %1137
    %1139 = vadd.xlane.f32.xlu0 %v1084
    %v1140 = vpop.xlane.xlu0 %1139
    %1141 = vadd.xlane.f32.xlu0 %v1085
    %v1142 = vpop.xlane.xlu0 %1141
    %1143 = vadd.xlane.f32.xlu0 %v1086
    %v1144 = vpop.xlane.xlu0 %1143
    %1145 = vadd.xlane.f32.xlu0 %v1087
    %v1146 = vpop.xlane.xlu0 %1145
    %1147 = vadd.xlane.f32.xlu0 %v1088
    %v1148 = vpop.xlane.xlu0 %1147
    %1149 = vadd.xlane.f32.xlu0 %v1089
    %v1150 = vpop.xlane.xlu0 %1149
    %1151 = vadd.xlane.f32.xlu0 %v1090
    %v1152 = vpop.xlane.xlu0 %1151
    %1153 = vadd.xlane.f32.xlu0 %v1091
    %v1154 = vpop.xlane.xlu0 %1153
    %1155 = vadd.xlane.f32.xlu0 %v1092
    %v1156 = vpop.xlane.xlu0 %1155
    %v1157 = vsub.f32 %v805, %v1094
    %v1158 = vsub.f32 %v806, %v1096
    %v1159 = vsub.f32 %v807, %v1098
    %v1160 = vsub.f32 %v808, %v1100
    %v1161 = vsub.f32 %v809, %v1102
    %v1162 = vsub.f32 %v810, %v1104
    %v1163 = vsub.f32 %v811, %v1106
    %v1164 = vsub.f32 %v812, %v1108
    %v1165 = vsub.f32 %v813, %v1110
    %v1166 = vsub.f32 %v814, %v1112
    %v1167 = vsub.f32 %v815, %v1114
    %v1168 = vsub.f32 %v816, %v1116
    %v1169 = vsub.f32 %v817, %v1118
    %v1170 = vsub.f32 %v818, %v1120
    %v1171 = vsub.f32 %v819, %v1122
    %v1172 = vsub.f32 %v820, %v1124
    %v1173 = vsub.f32 %v821, %v1126
    %v1174 = vsub.f32 %v822, %v1128
    %v1175 = vsub.f32 %v823, %v1130
    %v1176 = vsub.f32 %v824, %v1132
    %v1177 = vsub.f32 %v825, %v1134
    %v1178 = vsub.f32 %v826, %v1136
    %v1179 = vsub.f32 %v827, %v1138
    %v1180 = vsub.f32 %v828, %v1140
    %v1181 = vsub.f32 %v829, %v1142
    %v1182 = vsub.f32 %v830, %v1144
    %v1183 = vsub.f32 %v831, %v1146
    %v1184 = vsub.f32 %v832, %v1148
    %v1185 = vsub.f32 %v833, %v1150
    %v1186 = vsub.f32 %v834, %v1152
    %v1187 = vsub.f32 %v835, %v1154
    %v1188 = vsub.f32 %v836, %v1156
    %v1189 = vlaneseq
    %v1190 = vshrl.u32 %v1189, 7
    %v1191 = vadd.s32 %v1190, 8
    %v1192 = vadd.s32 %v1190, 16
    %v1193 = vadd.s32 %v1190, 24
    %v1194 = vadd.s32 %v1190, 32
    %v1195 = vadd.s32 %v1190, 40
    %v1196 = vadd.s32 %v1190, 48
    %v1197 = vadd.s32 %v1190, 56
    %v1198 = vadd.s32 %v1190, 64
    %v1199 = vadd.s32 %v1190, 72
    %v1200 = vadd.s32 %v1190, 80
    %v1201 = vadd.s32 %v1190, 88
    %v1202 = vadd.s32 %v1190, 96
    %v1203 = vadd.s32 %v1190, 104
    %v1204 = vadd.s32 %v1190, 112
    %v1205 = vadd.s32 %v1190, 120
    %v1206 = vadd.s32 %v1190, 128
    %v1207 = vadd.s32 %v1190, 136
    %v1208 = vadd.s32 %v1190, 144
    %v1209 = vadd.s32 %v1190, 152
    %v1210 = vadd.s32 %v1190, 160
    %v1211 = vadd.s32 %v1190, 168
    %v1212 = vadd.s32 %v1190, 176
    %v1213 = vadd.s32 %v1190, 184
    %v1214 = vadd.s32 %v1190, 192
    %v1215 = vadd.s32 %v1190, 200
    %v1216 = vadd.s32 %v1190, 208
    %v1217 = vadd.s32 %v1190, 216
    %v1218 = vadd.s32 %v1190, 224
    %v1219 = vadd.s32 %v1190, 232
    %v1220 = vadd.s32 %v1190, 240
    %v1221 = vadd.s32 %v1190, 248
    %s1222 = smul.u32 0, 256
    %v1223 = vstv %s1222
    %v1224 = vadd.s32 %v1190, %v1223
    %v1225 = vadd.s32 %v1191, %v1223
    %v1226 = vadd.s32 %v1192, %v1223
    %v1227 = vadd.s32 %v1193, %v1223
    %v1228 = vadd.s32 %v1194, %v1223
    %v1229 = vadd.s32 %v1195, %v1223
    %v1230 = vadd.s32 %v1196, %v1223
    %v1231 = vadd.s32 %v1197, %v1223
    %v1232 = vadd.s32 %v1198, %v1223
    %v1233 = vadd.s32 %v1199, %v1223
    %v1234 = vadd.s32 %v1200, %v1223
    %v1235 = vadd.s32 %v1201, %v1223
    %v1236 = vadd.s32 %v1202, %v1223
    %v1237 = vadd.s32 %v1203, %v1223
    %v1238 = vadd.s32 %v1204, %v1223
    %v1239 = vadd.s32 %v1205, %v1223
    %v1240 = vadd.s32 %v1206, %v1223
    %v1241 = vadd.s32 %v1207, %v1223
    %v1242 = vadd.s32 %v1208, %v1223
    %v1243 = vadd.s32 %v1209, %v1223
    %v1244 = vadd.s32 %v1210, %v1223
    %v1245 = vadd.s32 %v1211, %v1223
    %v1246 = vadd.s32 %v1212, %v1223
    %v1247 = vadd.s32 %v1213, %v1223
    %v1248 = vadd.s32 %v1214, %v1223
    %v1249 = vadd.s32 %v1215, %v1223
    %v1250 = vadd.s32 %v1216, %v1223
    %v1251 = vadd.s32 %v1217, %v1223
    %v1252 = vadd.s32 %v1218, %v1223
    %v1253 = vadd.s32 %v1219, %v1223
    %v1254 = vadd.s32 %v1220, %v1223
    %v1255 = vadd.s32 %v1221, %v1223
    %vm1256 = vcmp.lt.s32.totalorder %v1224, 16
    %vm1257 = vcmp.lt.s32.totalorder %v1225, 16
    %vm1258 = vcmp.lt.s32.totalorder %v1226, 16
    %vm1259 = vcmp.lt.s32.totalorder %v1227, 16
    %vm1260 = vcmp.lt.s32.totalorder %v1228, 16
    %vm1261 = vcmp.lt.s32.totalorder %v1229, 16
    %vm1262 = vcmp.lt.s32.totalorder %v1230, 16
    %vm1263 = vcmp.lt.s32.totalorder %v1231, 16
    %vm1264 = vcmp.lt.s32.totalorder %v1232, 16
    %vm1265 = vcmp.lt.s32.totalorder %v1233, 16
    %vm1266 = vcmp.lt.s32.totalorder %v1234, 16
    %vm1267 = vcmp.lt.s32.totalorder %v1235, 16
    %vm1268 = vcmp.lt.s32.totalorder %v1236, 16
    %vm1269 = vcmp.lt.s32.totalorder %v1237, 16
    %vm1270 = vcmp.lt.s32.totalorder %v1238, 16
    %vm1271 = vcmp.lt.s32.totalorder %v1239, 16
    %vm1272 = vcmp.lt.s32.totalorder %v1240, 16
    %vm1273 = vcmp.lt.s32.totalorder %v1241, 16
    %vm1274 = vcmp.lt.s32.totalorder %v1242, 16
    %vm1275 = vcmp.lt.s32.totalorder %v1243, 16
    %vm1276 = vcmp.lt.s32.totalorder %v1244, 16
    %vm1277 = vcmp.lt.s32.totalorder %v1245, 16
    %vm1278 = vcmp.lt.s32.totalorder %v1246, 16
    %vm1279 = vcmp.lt.s32.totalorder %v1247, 16
    %vm1280 = vcmp.lt.s32.totalorder %v1248, 16
    %vm1281 = vcmp.lt.s32.totalorder %v1249, 16
    %vm1282 = vcmp.lt.s32.totalorder %v1250, 16
    %vm1283 = vcmp.lt.s32.totalorder %v1251, 16
    %vm1284 = vcmp.lt.s32.totalorder %v1252, 16
    %vm1285 = vcmp.lt.s32.totalorder %v1253, 16
    %vm1286 = vcmp.lt.s32.totalorder %v1254, 16
    %vm1287 = vcmp.lt.s32.totalorder %v1255, 16
    %v1288 = vsel %vm1256, %v1157, 0.0
    %v1289 = vsel %vm1257, %v1158, 0.0
    %v1290 = vsel %vm1258, %v1159, 0.0
    %v1291 = vsel %vm1259, %v1160, 0.0
    %v1292 = vsel %vm1260, %v1161, 0.0
    %v1293 = vsel %vm1261, %v1162, 0.0
    %v1294 = vsel %vm1262, %v1163, 0.0
    %v1295 = vsel %vm1263, %v1164, 0.0
    %v1296 = vsel %vm1264, %v1165, 0.0
    %v1297 = vsel %vm1265, %v1166, 0.0
    %v1298 = vsel %vm1266, %v1167, 0.0
    %v1299 = vsel %vm1267, %v1168, 0.0
    %v1300 = vsel %vm1268, %v1169, 0.0
    %v1301 = vsel %vm1269, %v1170, 0.0
    %v1302 = vsel %vm1270, %v1171, 0.0
    %v1303 = vsel %vm1271, %v1172, 0.0
    %v1304 = vsel %vm1272, %v1173, 0.0
    %v1305 = vsel %vm1273, %v1174, 0.0
    %v1306 = vsel %vm1274, %v1175, 0.0
    %v1307 = vsel %vm1275, %v1176, 0.0
    %v1308 = vsel %vm1276, %v1177, 0.0
    %v1309 = vsel %vm1277, %v1178, 0.0
    %v1310 = vsel %vm1278, %v1179, 0.0
    %v1311 = vsel %vm1279, %v1180, 0.0
    %v1312 = vsel %vm1280, %v1181, 0.0
    %v1313 = vsel %vm1281, %v1182, 0.0
    %v1314 = vsel %vm1282, %v1183, 0.0
    %v1315 = vsel %vm1283, %v1184, 0.0
    %v1316 = vsel %vm1284, %v1185, 0.0
    %v1317 = vsel %vm1285, %v1186, 0.0
    %v1318 = vsel %vm1286, %v1187, 0.0
    %v1319 = vsel %vm1287, %v1188, 0.0
    %v1320 = vadd.f32 %v1288, %v1289
    %v1321 = vadd.f32 %v1320, %v1290
    %v1322 = vadd.f32 %v1321, %v1291
    %v1323 = vadd.f32 %v1322, %v1292
    %v1324 = vadd.f32 %v1323, %v1293
    %v1325 = vadd.f32 %v1324, %v1294
    %v1326 = vadd.f32 %v1325, %v1295
    %v1327 = vadd.f32 %v1326, %v1296
    %v1328 = vadd.f32 %v1327, %v1297
    %v1329 = vadd.f32 %v1328, %v1298
    %v1330 = vadd.f32 %v1329, %v1299
    %v1331 = vadd.f32 %v1330, %v1300
    %v1332 = vadd.f32 %v1331, %v1301
    %v1333 = vadd.f32 %v1332, %v1302
    %v1334 = vadd.f32 %v1333, %v1303
    %v1335 = vadd.f32 %v1334, %v1304
    %v1336 = vadd.f32 %v1335, %v1305
    %v1337 = vadd.f32 %v1336, %v1306
    %v1338 = vadd.f32 %v1337, %v1307
    %v1339 = vadd.f32 %v1338, %v1308
    %v1340 = vadd.f32 %v1339, %v1309
    %v1341 = vadd.f32 %v1340, %v1310
    %v1342 = vadd.f32 %v1341, %v1311
    %v1343 = vadd.f32 %v1342, %v1312
    %v1344 = vadd.f32 %v1343, %v1313
    %v1345 = vadd.f32 %v1344, %v1314
    %v1346 = vadd.f32 %v1345, %v1315
    %v1347 = vadd.f32 %v1346, %v1316
    %v1348 = vadd.f32 %v1347, %v1317
    %v1349 = vadd.f32 %v1348, %v1318
    %v1350 = vadd.f32 %v1349, %v1319
    %v1351 = vrot.slane %v1350, 4
    %v1352 = vadd.f32 %v1350, %v1351
    %v1353 = vrot.slane %v1352, 2
    %v1354 = vadd.f32 %v1352, %v1353
    %v1355 = vrot.slane %v1354, 1
    %v1356 = vadd.f32 %v1354, %v1355
    %p1357 = scmp.eq.s32.totalorder 0, 0
    // Predicated region
    $region14: #{tpu_custom_call.1} parent=1 // pred_check
      %p1358 = pneg %p1357
    $region15: #{tpu_custom_call.1} parent=1 // pred_check_branch
      %1360 = sbr.rel (%p1358) target = $region17
    $region16: #{tpu_custom_call.1} parent=1 // pred_region
      %vm1361 = vcmask 0
      %1362 = vst.msk [vmem:[#allocation4] sm:$0x1] %vm1361, 0.0
    $region17: #{tpu_custom_call.1} parent=1 // pred_fallthru
      _
    %v1363 = vld [vmem:[#allocation4] sm:$0x1]
    %v1364 = vadd.f32 %v1363, %v1356
    %vm1365 = vcmask 0
    %1366 = vst.msk [vmem:[#allocation4] sm:$0x1] %vm1365, %v1364
    // Predicated region
    $region18: #{tpu_custom_call.1} parent=1 // pred_check
      _
    $region19: #{tpu_custom_call.1} parent=1 // pred_check_branch
      %1368 = sbr.rel (0) target = $region21
    $region20: #{tpu_custom_call.1} parent=1 // pred_region
      %s1370 = ssub.s32 4096, 4096
      %1371 = vsyncadd [#allocation3], %s1370
      %s1372 = sshll.u32 [#allocation2], 4
      %s1373 = int_to_ptr.vmem [resolvable:$true] %s1372
      %1378 = dma.vmem_to_hbm [thread:$0]  %s1373, 4096, %s3, [#allocation3], 128, 128, 8
    $region21: #{tpu_custom_call.1} parent=1 // pred_fallthru
      _
    // Predicated region
    $region22: #{tpu_custom_call.1} parent=1 // pred_check
      _
    $region23: #{tpu_custom_call.1} parent=1 // pred_check_branch
      %1380 = sbr.rel (0) target = $region25
    $region24: #{tpu_custom_call.1} parent=1 // pred_region
      %s1382 = ssub.s32 16, 16
      %1383 = vsyncadd [#allocation5], %s1382
      %s1385 = sshll.u32 [#allocation4], 4
      %s1386 = int_to_ptr.vmem [resolvable:$true] %s1385
      %1388 = dma.vmem_to_hbm [thread:$0]  %s1386, 16, %s4, [#allocation5]
    $region25: #{tpu_custom_call.1} parent=1 // pred_fallthru
      _
    // Predicated region
    $region26: #{tpu_custom_call.1} parent=1 // pred_check
      _
    $region27: #{tpu_custom_call.1} parent=1 // pred_check_branch
      %1390 = sbr.rel (0) target = $region29
    $region28: #{tpu_custom_call.1} parent=1 // pred_region
      %1391 = dma.done [#allocation3], 4096
    $region29: #{tpu_custom_call.1} parent=1 // pred_fallthru
      _
    // Predicated region
    $region30: #{tpu_custom_call.1} parent=1 // pred_check
      _
    $region31: #{tpu_custom_call.1} parent=1 // pred_check_branch
      %1393 = sbr.rel (0) target = $region33
    $region32: #{tpu_custom_call.1} parent=1 // pred_region
      %1394 = dma.done [#allocation5], 16
    $region33: #{tpu_custom_call.1} parent=1 // pred_fallthru
      _
    %1395 = vsyncpa [#allocation3], 1
    %1396 = vsyncpa [#allocation5], 1

</llo_original>
